<compile_context>
chip_gen: v7x
topology: tpu7x:2x2x1
jax: 0.10.0
libtpu: 0.0.40
codegen_flags: <defaults>
</compile_context>

<pallas_src>
import jax
import jax.numpy as jnp
from jax import lax
from jax.experimental import pallas as pl
from jax.experimental.pallas import tpu as pltpu

EPS = 1e-5          # BatchNorm eps (PyTorch default)
NEG_SLOPE = 0.2     # GATConv leaky_relu negative slope (PyG default)
LANE = 128          # TPU lane width
ROW_PAD = 16        # node-count padding (bf16 sublane pack friendly)
NEG_INF = -1e30     # additive attention mask value


def _rup(n, m):
    return ((n + m - 1) // m) * m


def _pad2(x, rows, cols, dtype=jnp.float32):
    """Zero-pad a 2-D array to (rows, cols) and cast."""
    out = jnp.zeros((rows, cols), dtype)
    return out.at[: x.shape[0], : x.shape[1]].set(x.astype(dtype))


def _const_index_map(ndim):
    def im(l):
        return (0,) * ndim
    return im


def _layer_index_map(ndim_rest):
    def im(l):
        return (l,) + (0,) * ndim_rest
    return im


# ----------------------------------------------------------------------------
# Fused whole-model kernel (grid axis 0 = layer index)
# ----------------------------------------------------------------------------
def hetero_gnn_kernel(
    xs_raw_ref, xr_raw_ref,                    # raw node features (padded)
    a_sr_ref, a_rs_ref, bias_rr_ref,           # dense graph structure (VMEM-resident)
    w_in_s_ref, b_in_s_ref, w_in_r_ref, b_in_r_ref,   # input Linear projections
    w_sr_ref, b_sr_ref,                        # GraphConv subj->region  (K=2H, BN folded)
    w_rs_ref, b_rs_ref,                        # GraphConv region->subj  (K=2H, BN folded)
    wg_ref, asrc_ref, adst_ref,                # GATConv region->region (1 head)
    scale_ref, bgf_ref,                        # BN scale (GAT value path) / folded GAT bias+shift
    w_out_s_ref, b_out_s_ref, w_out_r_ref, b_out_r_ref,   # output Linear projections
    out_s_ref, out_r_ref,                      # outputs
    fs_ref, fr_ref,                            # persistent f32 feature scratch
):
    l = pl.program_id(0)
    nt = (((1,), (1,)), ((), ()))              # contract last axes ("NT" matmul)

    # ---- layer 0: fused input projections into resident feature scratch ----
    @pl.when(l == 0)
    def _():
        fs_ref[...] = (
            jnp.dot(xs_raw_ref[...].astype(jnp.bfloat16), w_in_s_ref[...],
                    preferred_element_type=jnp.float32) + b_in_s_ref[...])
        fr_ref[...] = (
            jnp.dot(xr_raw_ref[...].astype(jnp.bfloat16), w_in_r_ref[...],
                    preferred_element_type=jnp.float32) + b_in_r_ref[...])

    xs = fs_ref[...]                 # (Ns, H) f32
    xr = fr_ref[...]                 # (Nr, H) f32
    xs_b = xs.astype(jnp.bfloat16)
    xr_b = xr.astype(jnp.bfloat16)

    # ---- GraphConv subject -> region : lin_rel(sum_j x_j) + lin_root(x_i) ----
    # Fused as one K=2H matmul against [W_rel; W_root] (BN scale folded in).
    agg_r = jnp.dot(a_sr_ref[...], xs_b, preferred_element_type=jnp.float32)   # (Nr, H)
    cat_r = jnp.concatenate([agg_r, xr], axis=-1).astype(jnp.bfloat16)         # (Nr, 2H)
    gc_r = (jnp.dot(cat_r, w_sr_ref[...], preferred_element_type=jnp.float32)
            + b_sr_ref[...])

    # ---- GraphConv region -> subject (bias carries BN shift) ----------------
    agg_s = jnp.dot(a_rs_ref[...], xr_b, preferred_element_type=jnp.float32)   # (Ns, H)
    cat_s = jnp.concatenate([agg_s, xs], axis=-1).astype(jnp.bfloat16)         # (Ns, 2H)
    new_s = (jnp.dot(cat_s, w_rs_ref[...], preferred_element_type=jnp.float32)
             + b_rs_ref[...])

    # ---- GATConv region -> region (heads=1, self loops already in bias) -----
    h = jnp.dot(xr_b, wg_ref[...], preferred_element_type=jnp.float32)         # (Nr, H) f32
    e_dst = lax.dot_general(h, adst_ref[...], nt,
                            preferred_element_type=jnp.float32)                # (Nr, 1)
    e_src = lax.dot_general(asrc_ref[...], h, nt,
                            preferred_element_type=jnp.float32)                # (1, Nr)
    scores = e_dst + e_src                                                     # (Nr, Nr)
    scores = jnp.where(scores >= 0.0, scores, NEG_SLOPE * scores)              # leaky_relu
    scores = scores + bias_rr_ref[...]                                         # 0 / -1e30 mask
    m = jnp.max(scores, axis=-1, keepdims=True)
    p = jnp.exp(scores - m)                    # masked entries underflow to 0
    alpha = p * pl.reciprocal(jnp.sum(p, axis=-1, keepdims=True), approx=True)
    h_v = (h * scale_ref[...]).astype(jnp.bfloat16)        # BN scale folded on value path
    gat_r = (jnp.dot(alpha.astype(jnp.bfloat16), h_v,
                     preferred_element_type=jnp.float32) + bgf_ref[...])

    # ---- HeteroConv sum + (BN folded) + ReLU; update resident features ------
    new_s = jnp.maximum(new_s, 0.0)
    new_r = jnp.maximum(gc_r + gat_r, 0.0)
    fs_ref[...] = new_s
    fr_ref[...] = new_r

    # ---- last layer: fused output projections (reuse local activations) -----
    @pl.when(l == pl.num_programs(0) - 1)
    def _():
        out_s_ref[...] = (
            jnp.dot(new_s.astype(jnp.bfloat16), w_out_s_ref[...],
                    preferred_element_type=jnp.float32) + b_out_s_ref[...])
        out_r_ref[...] = (
            jnp.dot(new_r.astype(jnp.bfloat16), w_out_r_ref[...],
                    preferred_element_type=jnp.float32) + b_out_r_ref[...])


# ----------------------------------------------------------------------------
# Host-side glue: padding, dense adjacency, BN folding, weight stacking, call.
# ----------------------------------------------------------------------------
def hetero_gnn_forward(x_dict, edge_index_dict, params):
    hidden = params["w_lin_region"].shape[1]
    out_ch = params["w_out_subject"].shape[1]
    in_s = params["w_lin_subject"].shape[0]
    num_layers = len(params["layers"])

    ns, nr = x_dict["subject"].shape[0], x_dict["region"].shape[0]
    nsp, nrp = _rup(ns, ROW_PAD), _rup(nr, ROW_PAD)
    hp = _rup(hidden, LANE)
    op = _rup(out_ch, LANE)
    isp = _rup(in_s, LANE)
    bf = jnp.bfloat16

    # --- dense padded graph structure (padded rows/cols have no edges) ---
    src_sr, dst_sr = edge_index_dict[("subject", "has_region", "region")]
    a_sr = jnp.zeros((nrp, nsp), jnp.float32).at[dst_sr, src_sr].add(1.0)
    src_rs, dst_rs = edge_index_dict[("region", "rev_has_region", "subject")]
    a_rs = jnp.zeros((nsp, nrp), jnp.float32).at[dst_rs, src_rs].add(1.0)
    src_rr, dst_rr = edge_index_dict[("region", "is_functionally_connected", "region")]
    mask_rr = jnp.zeros((nrp, nrp), jnp.float32).at[dst_rr, src_rr].set(1.0)
    mask_rr = jnp.maximum(mask_rr, jnp.eye(nrp, dtype=jnp.float32))  # GAT add_self_loops
    # additive attention bias: 0 on edges (incl. self loops), -1e30 elsewhere
    bias_rr = jnp.where(mask_rr > 0.0, 0.0, NEG_INF).astype(jnp.float32)

    # --- padded inputs / input & output projections ---
    xs_raw = _pad2(x_dict["subject"], nsp, isp)
    xr_raw = _pad2(x_dict["region"], nrp, hp)
    w_in_s = _pad2(params["w_lin_subject"], isp, hp, bf)
    b_in_s = _pad2(params["b_lin_subject"], 1, hp)
    w_in_r = _pad2(params["w_lin_region"], hp, hp, bf)
    b_in_r = _pad2(params["b_lin_region"], 1, hp)
    w_out_s = _pad2(params["w_out_subject"], hp, op, bf)
    b_out_s = _pad2(params["b_out_subject"], 1, op)
    w_out_r = _pad2(params["w_out_region"], hp, op, bf)
    b_out_r = _pad2(params["b_out_region"], 1, op)

    # --- per-layer weights: BN fold + K=2H concat + pad + stack ---
    w_sr_l, b_sr_l, w_rs_l, b_rs_l = [], [], [], []
    wg_l, asrc_l, adst_l, scale_l, bgf_l = [], [], [], [], []
    for lp in params["layers"]:
        scale = lp["gamma"] * lax.rsqrt(lp["rvar"] + EPS)      # (1, hidden)
        shift = lp["beta"] - lp["rmean"] * scale
        w_sr = jnp.concatenate([_pad2(lp["wrel_sr"] * scale, hp, hp),
                                _pad2(lp["wroot_sr"] * scale, hp, hp)], axis=0)
        w_rs = jnp.concatenate([_pad2(lp["wrel_rs"] * scale, hp, hp),
                                _pad2(lp["wroot_rs"] * scale, hp, hp)], axis=0)
        w_sr_l.append(w_sr.astype(bf))
        w_rs_l.append(w_rs.astype(bf))
        b_sr_l.append(_pad2(lp["brel_sr"] * scale, 1, hp))     # region shift lives in GAT bias
        b_rs_l.append(_pad2(lp["brel_rs"] * scale + shift, 1, hp))
        wg_l.append(_pad2(lp["wg"], hp, hp, bf))
        asrc_l.append(_pad2(lp["asrc"], 1, hp))
        adst_l.append(_pad2(lp["adst"], 1, hp))
        scale_l.append(_pad2(scale, 1, hp))
        bgf_l.append(_pad2(lp["bg"] * scale + shift, 1, hp))

    w_sr_all = jnp.stack(w_sr_l)       # (L, 2H, H) bf16
    b_sr_all = jnp.stack(b_sr_l)       # (L, 1, H)  f32
    w_rs_all = jnp.stack(w_rs_l)
    b_rs_all = jnp.stack(b_rs_l)
    wg_all = jnp.stack(wg_l)           # (L, H, H)  bf16
    asrc_all = jnp.stack(asrc_l)
    adst_all = jnp.stack(adst_l)
    scale_all = jnp.stack(scale_l)
    bgf_all = jnp.stack(bgf_l)

    in_arrays = (
        xs_raw, xr_raw,
        a_sr.astype(bf), a_rs.astype(bf), bias_rr,
        w_in_s, b_in_s, w_in_r, b_in_r,
        w_sr_all, b_sr_all, w_rs_all, b_rs_all,
        wg_all, asrc_all, adst_all, scale_all, bgf_all,
        w_out_s, b_out_s, w_out_r, b_out_r,
    )

    def full_spec(shape):
        return pl.BlockSpec(shape, _const_index_map(len(shape)))

    def layer_spec(shape):
        return pl.BlockSpec((None,) + shape, _layer_index_map(len(shape)))

    in_specs = [
        full_spec((nsp, isp)), full_spec((nrp, hp)),
        full_spec((nrp, nsp)), full_spec((nsp, nrp)), full_spec((nrp, nrp)),
        full_spec((isp, hp)), full_spec((1, hp)),
        full_spec((hp, hp)), full_spec((1, hp)),
        layer_spec((2 * hp, hp)), layer_spec((1, hp)),
        layer_spec((2 * hp, hp)), layer_spec((1, hp)),
        layer_spec((hp, hp)), layer_spec((1, hp)), layer_spec((1, hp)),
        layer_spec((1, hp)), layer_spec((1, hp)),
        full_spec((hp, op)), full_spec((1, op)),
        full_spec((hp, op)), full_spec((1, op)),
    ]

    out_s, out_r = pl.pallas_call(
        hetero_gnn_kernel,
        out_shape=(
            jax.ShapeDtypeStruct((nsp, op), jnp.float32),
            jax.ShapeDtypeStruct((nrp, op), jnp.float32),
        ),
        grid_spec=pltpu.PrefetchScalarGridSpec(
            num_scalar_prefetch=0,
            grid=(num_layers,),
            in_specs=in_specs,
            out_specs=(
                pl.BlockSpec((nsp, op), _const_index_map(2)),
                pl.BlockSpec((nrp, op), _const_index_map(2)),
            ),
            scratch_shapes=[
                pltpu.VMEM((nsp, hp), jnp.float32),
                pltpu.VMEM((nrp, hp), jnp.float32),
            ],
        ),
        compiler_params=pltpu.CompilerParams(
            dimension_semantics=("arbitrary",)),
    )(*in_arrays)

    return {
        "subject": out_s[:ns, :out_ch],
        "region": out_r[:nr, :out_ch],
    }


# ----------------------------------------------------------------------------
# Deterministic parameter construction (natural/unpadded shapes)
# ----------------------------------------------------------------------------
def init_params(key, in_subject, hidden, out_channels, num_layers):
    keys = jax.random.split(key, 8 + num_layers)

    def w(k, shape, scale=0.1):
        return scale * jax.random.normal(k, shape, dtype=jnp.float32)

    params = {
        "w_lin_subject": w(keys[0], (in_subject, hidden)),
        "b_lin_subject": w(keys[1], (1, hidden)),
        "w_lin_region": w(keys[2], (hidden, hidden)),
        "b_lin_region": w(keys[3], (1, hidden)),
        "w_out_subject": w(keys[4], (hidden, out_channels)),
        "b_out_subject": w(keys[5], (1, out_channels)),
        "w_out_region": w(keys[6], (hidden, out_channels)),
        "b_out_region": w(keys[7], (1, out_channels)),
        "layers": [],
    }
    for l in range(num_layers):
        lk = jax.random.split(keys[8 + l], 12)
        params["layers"].append({
            "wrel_sr": w(lk[0], (hidden, hidden)),
            "brel_sr": w(lk[1], (1, hidden)),
            "wroot_sr": w(lk[2], (hidden, hidden)),
            "wrel_rs": w(lk[3], (hidden, hidden)),
            "brel_rs": w(lk[4], (1, hidden)),
            "wroot_rs": w(lk[5], (hidden, hidden)),
            "wg": w(lk[6], (hidden, hidden)),         # GAT lin (no bias)
            "asrc": w(lk[7], (1, hidden)),            # att_src (heads=1)
            "adst": w(lk[8], (1, hidden)),            # att_dst (heads=1)
            "bg": w(lk[9], (1, hidden)),              # GAT output bias
            "gamma": 1.0 + w(lk[10], (1, hidden)),    # BatchNorm weight
            "beta": w(lk[11], (1, hidden)),           # BatchNorm bias
            "rmean": jnp.zeros((1, hidden), jnp.float32),  # running_mean
            "rvar": jnp.ones((1, hidden), jnp.float32),    # running_var
        })
    return params


if __name__ == "__main__":
    NS, NR = 8, 16            # subject nodes, region nodes
    HIDDEN, OUT, LAYERS = 32, 4, 2

    key = jax.random.PRNGKey(0)
    k_s, k_r, k_p = jax.random.split(key, 3)

    x_dict = {
        "subject": jax.random.normal(k_s, (NS, 3), dtype=jnp.float32),
        "region": jax.random.normal(k_r, (NR, HIDDEN), dtype=jnp.float32),
    }

    subj = jnp.arange(NS)
    e_sr = jnp.stack([
        jnp.concatenate([subj, subj]),
        jnp.concatenate([(2 * subj) % NR, (2 * subj + 1) % NR]),
    ])                                     # subject -> region
    e_rs = jnp.stack([e_sr[1], e_sr[0]])   # reversed edges
    reg = jnp.arange(NR)
    e_rr = jnp.stack([
        jnp.concatenate([reg, reg]),
        jnp.concatenate([(reg + 1) % NR, (reg + 3) % NR]),
    ])                                     # region -> region

    edge_index_dict = {
        ("subject", "has_region", "region"): (e_sr[0], e_sr[1]),
        ("region", "rev_has_region", "subject"): (e_rs[0], e_rs[1]),
        ("region", "is_functionally_connected", "region"): (e_rr[0], e_rr[1]),
    }

    params = init_params(k_p, in_subject=3, hidden=HIDDEN,
                         out_channels=OUT, num_layers=LAYERS)

    out = hetero_gnn_forward(x_dict, edge_index_dict, params)
    jax.block_until_ready(out)

    assert out["subject"].shape == (NS, OUT)
    assert out["region"].shape == (NR, OUT)
    assert bool(jnp.all(jnp.isfinite(out["subject"])))
    assert bool(jnp.all(jnp.isfinite(out["region"])))
    print("KERNEL_OK")
</pallas_src>

<mosaic_0001>
module attributes {stable_mosaic.version = 11 : i64} {
  func.func @hetero_gnn_kernel(%arg0: i32, %arg1: memref<16x128xf32, #tpu.memory_space<vmem>>, %arg2: memref<16x128xf32, #tpu.memory_space<vmem>>, %arg3: memref<16x16xbf16, #tpu.memory_space<vmem>>, %arg4: memref<16x16xbf16, #tpu.memory_space<vmem>>, %arg5: memref<16x16xf32, #tpu.memory_space<vmem>>, %arg6: memref<128x128xbf16, #tpu.memory_space<vmem>>, %arg7: memref<1x128xf32, #tpu.memory_space<vmem>>, %arg8: memref<128x128xbf16, #tpu.memory_space<vmem>>, %arg9: memref<1x128xf32, #tpu.memory_space<vmem>>, %arg10: memref<1x256x128xbf16, #tpu.memory_space<vmem>>, %arg11: memref<1x1x128xf32, #tpu.memory_space<vmem>>, %arg12: memref<1x256x128xbf16, #tpu.memory_space<vmem>>, %arg13: memref<1x1x128xf32, #tpu.memory_space<vmem>>, %arg14: memref<1x128x128xbf16, #tpu.memory_space<vmem>>, %arg15: memref<1x1x128xf32, #tpu.memory_space<vmem>>, %arg16: memref<1x1x128xf32, #tpu.memory_space<vmem>>, %arg17: memref<1x1x128xf32, #tpu.memory_space<vmem>>, %arg18: memref<1x1x128xf32, #tpu.memory_space<vmem>>, %arg19: memref<128x128xbf16, #tpu.memory_space<vmem>>, %arg20: memref<1x128xf32, #tpu.memory_space<vmem>>, %arg21: memref<128x128xbf16, #tpu.memory_space<vmem>>, %arg22: memref<1x128xf32, #tpu.memory_space<vmem>>, %arg23: memref<16x128xf32, #tpu.memory_space<vmem>>, %arg24: memref<16x128xf32, #tpu.memory_space<vmem>>, %arg25: memref<16x128xf32, #tpu.memory_space<vmem>>, %arg26: memref<16x128xf32, #tpu.memory_space<vmem>>) attributes {dimension_semantics = [#tpu.dimension_semantics<arbitrary>], iteration_bounds = array<i64: 2>, scalar_prefetch = 0 : i64, scratch_operands = 2 : i64, tpu.core_type = #tpu.core_type<tc>, window_params = [{pipeline_mode = #tpu.pipeline_mode<synchronous>, transform_indices = @transform_0, window_bounds = array<i64: 16, 128>}, {pipeline_mode = #tpu.pipeline_mode<synchronous>, transform_indices = @transform_1, window_bounds = array<i64: 16, 128>}, {pipeline_mode = #tpu.pipeline_mode<synchronous>, transform_indices = @transform_2, window_bounds = array<i64: 16, 16>}, {pipeline_mode = #tpu.pipeline_mode<synchronous>, transform_indices = @transform_3, window_bounds = array<i64: 16, 16>}, {pipeline_mode = #tpu.pipeline_mode<synchronous>, transform_indices = @transform_4, window_bounds = array<i64: 16, 16>}, {pipeline_mode = #tpu.pipeline_mode<synchronous>, transform_indices = @transform_5, window_bounds = array<i64: 128, 128>}, {pipeline_mode = #tpu.pipeline_mode<synchronous>, transform_indices = @transform_6, window_bounds = array<i64: 1, 128>}, {pipeline_mode = #tpu.pipeline_mode<synchronous>, transform_indices = @transform_7, window_bounds = array<i64: 128, 128>}, {pipeline_mode = #tpu.pipeline_mode<synchronous>, transform_indices = @transform_8, window_bounds = array<i64: 1, 128>}, {transform_indices = @transform_9, window_bounds = array<i64: 1, 256, 128>}, {transform_indices = @transform_10, window_bounds = array<i64: 1, 1, 128>}, {transform_indices = @transform_11, window_bounds = array<i64: 1, 256, 128>}, {transform_indices = @transform_12, window_bounds = array<i64: 1, 1, 128>}, {transform_indices = @transform_13, window_bounds = array<i64: 1, 128, 128>}, {transform_indices = @transform_14, window_bounds = array<i64: 1, 1, 128>}, {transform_indices = @transform_15, window_bounds = array<i64: 1, 1, 128>}, {transform_indices = @transform_16, window_bounds = array<i64: 1, 1, 128>}, {transform_indices = @transform_17, window_bounds = array<i64: 1, 1, 128>}, {pipeline_mode = #tpu.pipeline_mode<synchronous>, transform_indices = @transform_18, window_bounds = array<i64: 128, 128>}, {pipeline_mode = #tpu.pipeline_mode<synchronous>, transform_indices = @transform_19, window_bounds = array<i64: 1, 128>}, {pipeline_mode = #tpu.pipeline_mode<synchronous>, transform_indices = @transform_20, window_bounds = array<i64: 128, 128>}, {pipeline_mode = #tpu.pipeline_mode<synchronous>, transform_indices = @transform_21, window_bounds = array<i64: 1, 128>}, {pipeline_mode = #tpu.pipeline_mode<synchronous>, transform_indices = @transform_22, window_bounds = array<i64: 16, 128>}, {pipeline_mode = #tpu.pipeline_mode<synchronous>, transform_indices = @transform_23, window_bounds = array<i64: 16, 128>}]} {
    %c0_i32 = arith.constant 0 : i32
    %0 = arith.cmpi eq, %arg0, %c0_i32 : i32
    %1 = arith.extui %0 : i1 to i32
    %c0_i32_0 = arith.constant 0 : i32
    %2 = arith.cmpi ne, %1, %c0_i32_0 : i32
    scf.if %2 {
      %c0_55 = arith.constant 0 : index
      %c0_56 = arith.constant 0 : index
      %79 = vector.load %arg1[%c0_55, %c0_56] : memref<16x128xf32, #tpu.memory_space<vmem>>, vector<16x128xf32>
      %80 = arith.truncf %79 : vector<16x128xf32> to vector<16x128xbf16>
      %c0_57 = arith.constant 0 : index
      %c0_58 = arith.constant 0 : index
      %81 = vector.load %arg6[%c0_57, %c0_58] : memref<128x128xbf16, #tpu.memory_space<vmem>>, vector<128x128xbf16>
      %cst_59 = arith.constant dense<0.000000e+00> : vector<16x128xf32>
      %82 = tpu.matmul %80, %81, %cst_59 {dimension_numbers = #tpu.dot_dimension_numbers<[1], [0], [0], [1], [0, 0, 1, 1], [], []>} : vector<16x128xbf16>, vector<128x128xbf16>, vector<16x128xf32> -> vector<16x128xf32>
      %c0_60 = arith.constant 0 : index
      %c0_61 = arith.constant 0 : index
      %83 = vector.load %arg7[%c0_60, %c0_61] : memref<1x128xf32, #tpu.memory_space<vmem>>, vector<1x128xf32>
      %84 = vector.broadcast %83 : vector<1x128xf32> to vector<16x128xf32>
      %85 = arith.addf %82, %84 : vector<16x128xf32>
      %c0_62 = arith.constant 0 : index
      %c0_63 = arith.constant 0 : index
      %86 = vector.load %arg25[%c0_62, %c0_63] : memref<16x128xf32, #tpu.memory_space<vmem>>, vector<16x128xf32>
      tpu.vector_store %arg25[%c0_62, %c0_63], %85 {strides = array<i32>} : memref<16x128xf32, #tpu.memory_space<vmem>>, vector<16x128xf32>,
      %c0_64 = arith.constant 0 : index
      %c0_65 = arith.constant 0 : index
      %87 = vector.load %arg2[%c0_64, %c0_65] : memref<16x128xf32, #tpu.memory_space<vmem>>, vector<16x128xf32>
      %88 = arith.truncf %87 : vector<16x128xf32> to vector<16x128xbf16>
      %c0_66 = arith.constant 0 : index
      %c0_67 = arith.constant 0 : index
      %89 = vector.load %arg8[%c0_66, %c0_67] : memref<128x128xbf16, #tpu.memory_space<vmem>>, vector<128x128xbf16>
      %cst_68 = arith.constant dense<0.000000e+00> : vector<16x128xf32>
      %90 = tpu.matmul %88, %89, %cst_68 {dimension_numbers = #tpu.dot_dimension_numbers<[1], [0], [0], [1], [0, 0, 1, 1], [], []>} : vector<16x128xbf16>, vector<128x128xbf16>, vector<16x128xf32> -> vector<16x128xf32>
      %c0_69 = arith.constant 0 : index
      %c0_70 = arith.constant 0 : index
      %91 = vector.load %arg9[%c0_69, %c0_70] : memref<1x128xf32, #tpu.memory_space<vmem>>, vector<1x128xf32>
      %92 = vector.broadcast %91 : vector<1x128xf32> to vector<16x128xf32>
      %93 = arith.addf %90, %92 : vector<16x128xf32>
      %c0_71 = arith.constant 0 : index
      %c0_72 = arith.constant 0 : index
      %94 = vector.load %arg26[%c0_71, %c0_72] : memref<16x128xf32, #tpu.memory_space<vmem>>, vector<16x128xf32>
      tpu.vector_store %arg26[%c0_71, %c0_72], %93 {strides = array<i32>} : memref<16x128xf32, #tpu.memory_space<vmem>>, vector<16x128xf32>,
    } else {
    }
    %c0 = arith.constant 0 : index
    %c0_1 = arith.constant 0 : index
    %3 = vector.load %arg25[%c0, %c0_1] : memref<16x128xf32, #tpu.memory_space<vmem>>, vector<16x128xf32>
    %c0_2 = arith.constant 0 : index
    %c0_3 = arith.constant 0 : index
    %4 = vector.load %arg26[%c0_2, %c0_3] : memref<16x128xf32, #tpu.memory_space<vmem>>, vector<16x128xf32>
    %5 = arith.truncf %3 : vector<16x128xf32> to vector<16x128xbf16>
    %6 = arith.truncf %4 : vector<16x128xf32> to vector<16x128xbf16>
    %c0_4 = arith.constant 0 : index
    %c0_5 = arith.constant 0 : index
    %7 = vector.load %arg3[%c0_4, %c0_5] : memref<16x16xbf16, #tpu.memory_space<vmem>>, vector<16x16xbf16>
    %cst = arith.constant dense<0.000000e+00> : vector<16x128xf32>
    %8 = tpu.matmul %7, %5, %cst {dimension_numbers = #tpu.dot_dimension_numbers<[1], [0], [0], [1], [0, 0, 1, 1], [], []>} : vector<16x16xbf16>, vector<16x128xbf16>, vector<16x128xf32> -> vector<16x128xf32>
    %9 = tpu.concatenate %8, %4 in 1 : vector<16x128xf32>, vector<16x128xf32> -> vector<16x256xf32>
    %10 = arith.truncf %9 : vector<16x256xf32> to vector<16x256xbf16>
    %c0_6 = arith.constant 0 : index
    %c0_7 = arith.constant 0 : index
    %c0_8 = arith.constant 0 : index
    %11 = vector.load %arg10[%c0_6, %c0_7, %c0_8] : memref<1x256x128xbf16, #tpu.memory_space<vmem>>, vector<1x256x128xbf16>
    %12 = vector.shape_cast %11 : vector<1x256x128xbf16> to vector<256x128xbf16>
    %cst_9 = arith.constant dense<0.000000e+00> : vector<16x128xf32>
    %13 = tpu.matmul %10, %12, %cst_9 {dimension_numbers = #tpu.dot_dimension_numbers<[1], [0], [0], [1], [0, 0, 1, 1], [], []>} : vector<16x256xbf16>, vector<256x128xbf16>, vector<16x128xf32> -> vector<16x128xf32>
    %c0_10 = arith.constant 0 : index
    %c0_11 = arith.constant 0 : index
    %c0_12 = arith.constant 0 : index
    %14 = vector.load %arg11[%c0_10, %c0_11, %c0_12] : memref<1x1x128xf32, #tpu.memory_space<vmem>>, vector<1x1x128xf32>
    %15 = vector.shape_cast %14 : vector<1x1x128xf32> to vector<1x128xf32>
    %16 = vector.broadcast %15 : vector<1x128xf32> to vector<16x128xf32>
    %17 = arith.addf %13, %16 : vector<16x128xf32>
    %c0_13 = arith.constant 0 : index
    %c0_14 = arith.constant 0 : index
    %18 = vector.load %arg4[%c0_13, %c0_14] : memref<16x16xbf16, #tpu.memory_space<vmem>>, vector<16x16xbf16>
    %cst_15 = arith.constant dense<0.000000e+00> : vector<16x128xf32>
    %19 = tpu.matmul %18, %6, %cst_15 {dimension_numbers = #tpu.dot_dimension_numbers<[1], [0], [0], [1], [0, 0, 1, 1], [], []>} : vector<16x16xbf16>, vector<16x128xbf16>, vector<16x128xf32> -> vector<16x128xf32>
    %20 = tpu.concatenate %19, %3 in 1 : vector<16x128xf32>, vector<16x128xf32> -> vector<16x256xf32>
    %21 = arith.truncf %20 : vector<16x256xf32> to vector<16x256xbf16>
    %c0_16 = arith.constant 0 : index
    %c0_17 = arith.constant 0 : index
    %c0_18 = arith.constant 0 : index
    %22 = vector.load %arg12[%c0_16, %c0_17, %c0_18] : memref<1x256x128xbf16, #tpu.memory_space<vmem>>, vector<1x256x128xbf16>
    %23 = vector.shape_cast %22 : vector<1x256x128xbf16> to vector<256x128xbf16>
    %cst_19 = arith.constant dense<0.000000e+00> : vector<16x128xf32>
    %24 = tpu.matmul %21, %23, %cst_19 {dimension_numbers = #tpu.dot_dimension_numbers<[1], [0], [0], [1], [0, 0, 1, 1], [], []>} : vector<16x256xbf16>, vector<256x128xbf16>, vector<16x128xf32> -> vector<16x128xf32>
    %c0_20 = arith.constant 0 : index
    %c0_21 = arith.constant 0 : index
    %c0_22 = arith.constant 0 : index
    %25 = vector.load %arg13[%c0_20, %c0_21, %c0_22] : memref<1x1x128xf32, #tpu.memory_space<vmem>>, vector<1x1x128xf32>
    %26 = vector.shape_cast %25 : vector<1x1x128xf32> to vector<1x128xf32>
    %27 = vector.broadcast %26 : vector<1x128xf32> to vector<16x128xf32>
    %28 = arith.addf %24, %27 : vector<16x128xf32>
    %c0_23 = arith.constant 0 : index
    %c0_24 = arith.constant 0 : index
    %c0_25 = arith.constant 0 : index
    %29 = vector.load %arg14[%c0_23, %c0_24, %c0_25] : memref<1x128x128xbf16, #tpu.memory_space<vmem>>, vector<1x128x128xbf16>
    %30 = vector.shape_cast %29 : vector<1x128x128xbf16> to vector<128x128xbf16>
    %cst_26 = arith.constant dense<0.000000e+00> : vector<16x128xf32>
    %31 = tpu.matmul %6, %30, %cst_26 {dimension_numbers = #tpu.dot_dimension_numbers<[1], [0], [0], [1], [0, 0, 1, 1], [], []>} : vector<16x128xbf16>, vector<128x128xbf16>, vector<16x128xf32> -> vector<16x128xf32>
    %c0_27 = arith.constant 0 : index
    %c0_28 = arith.constant 0 : index
    %c0_29 = arith.constant 0 : index
    %32 = vector.load %arg16[%c0_27, %c0_28, %c0_29] : memref<1x1x128xf32, #tpu.memory_space<vmem>>, vector<1x1x128xf32>
    %33 = vector.shape_cast %32 : vector<1x1x128xf32> to vector<1x128xf32>
    %cst_30 = arith.constant dense<0.000000e+00> : vector<16x1xf32>
    %34 = tpu.matmul %31, %33, %cst_30 {dimension_numbers = #tpu.dot_dimension_numbers<[1], [1], [0], [0], [0, 0, 1, 0], [], []>} : vector<16x128xf32>, vector<1x128xf32>, vector<16x1xf32> -> vector<16x1xf32>
    %c0_31 = arith.constant 0 : index
    %c0_32 = arith.constant 0 : index
    %c0_33 = arith.constant 0 : index
    %35 = vector.load %arg15[%c0_31, %c0_32, %c0_33] : memref<1x1x128xf32, #tpu.memory_space<vmem>>, vector<1x1x128xf32>
    %36 = vector.shape_cast %35 : vector<1x1x128xf32> to vector<1x128xf32>
    %cst_34 = arith.constant dense<0.000000e+00> : vector<1x16xf32>
    %37 = tpu.matmul %36, %31, %cst_34 {dimension_numbers = #tpu.dot_dimension_numbers<[1], [1], [0], [0], [0, 0, 1, 0], [], []>} : vector<1x128xf32>, vector<16x128xf32>, vector<1x16xf32> -> vector<1x16xf32>
    %38 = vector.broadcast %34 : vector<16x1xf32> to vector<16x16xf32>
    %39 = vector.broadcast %37 : vector<1x16xf32> to vector<16x16xf32>
    %40 = arith.addf %38, %39 : vector<16x16xf32>
    %cst_35 = arith.constant 0.000000e+00 : f32
    %41 = vector.broadcast %cst_35 : f32 to vector<16x16xf32>
    %42 = arith.cmpf oge, %40, %41 : vector<16x16xf32>
    %cst_36 = arith.constant 2.000000e-01 : f32
    %43 = vector.broadcast %cst_36 : f32 to vector<16x16xf32>
    %44 = arith.mulf %43, %40 : vector<16x16xf32>
    %45 = arith.select %42, %40, %44 : vector<16x16xi1>, vector<16x16xf32>
    %c0_37 = arith.constant 0 : index
    %c0_38 = arith.constant 0 : index
    %46 = vector.load %arg5[%c0_37, %c0_38] : memref<16x16xf32, #tpu.memory_space<vmem>>, vector<16x16xf32>
    %47 = arith.addf %45, %46 : vector<16x16xf32>
    %cst_39 = arith.constant dense<0xFF800000> : vector<16xf32>
    %48 = vector.multi_reduction <maximumf>, %47, %cst_39 [1] : vector<16x16xf32> to vector<16xf32>
    %49 = vector.shape_cast %48 : vector<16xf32> to vector<16x1xf32>
    %50 = vector.broadcast %49 : vector<16x1xf32> to vector<16x16xf32>
    %51 = arith.subf %47, %50 : vector<16x16xf32>
    %52 = math.exp %51 : vector<16x16xf32>
    %cst_40 = arith.constant dense<0.000000e+00> : vector<16xf32>
    %53 = vector.multi_reduction <add>, %52, %cst_40 [1] : vector<16x16xf32> to vector<16xf32>
    %54 = vector.shape_cast %53 : vector<16xf32> to vector<16x1xf32>
    %55 = tpu.reciprocal %54 {approx = true} : vector<16x1xf32> -> vector<16x1xf32>
    %56 = vector.broadcast %55 : vector<16x1xf32> to vector<16x16xf32>
    %57 = arith.mulf %52, %56 : vector<16x16xf32>
    %c0_41 = arith.constant 0 : index
    %c0_42 = arith.constant 0 : index
    %c0_43 = arith.constant 0 : index
    %58 = vector.load %arg17[%c0_41, %c0_42, %c0_43] : memref<1x1x128xf32, #tpu.memory_space<vmem>>, vector<1x1x128xf32>
    %59 = vector.shape_cast %58 : vector<1x1x128xf32> to vector<1x128xf32>
    %60 = vector.broadcast %59 : vector<1x128xf32> to vector<16x128xf32>
    %61 = arith.mulf %31, %60 : vector<16x128xf32>
    %62 = arith.truncf %61 : vector<16x128xf32> to vector<16x128xbf16>
    %63 = arith.truncf %57 : vector<16x16xf32> to vector<16x16xbf16>
    %cst_44 = arith.constant dense<0.000000e+00> : vector<16x128xf32>
    %64 = tpu.matmul %63, %62, %cst_44 {dimension_numbers = #tpu.dot_dimension_numbers<[1], [0], [0], [1], [0, 0, 1, 1], [], []>} : vector<16x16xbf16>, vector<16x128xbf16>, vector<16x128xf32> -> vector<16x128xf32>
    %c0_45 = arith.constant 0 : index
    %c0_46 = arith.constant 0 : index
    %c0_47 = arith.constant 0 : index
    %65 = vector.load %arg18[%c0_45, %c0_46, %c0_47] : memref<1x1x128xf32, #tpu.memory_space<vmem>>, vector<1x1x128xf32>
    %66 = vector.shape_cast %65 : vector<1x1x128xf32> to vector<1x128xf32>
    %67 = vector.broadcast %66 : vector<1x128xf32> to vector<16x128xf32>
    %68 = arith.addf %64, %67 : vector<16x128xf32>
    %cst_48 = arith.constant 0.000000e+00 : f32
    %69 = vector.broadcast %cst_48 : f32 to vector<16x128xf32>
    %70 = arith.maximumf %28, %69 : vector<16x128xf32>
    %71 = arith.addf %17, %68 : vector<16x128xf32>
    %cst_49 = arith.constant 0.000000e+00 : f32
    %72 = vector.broadcast %cst_49 : f32 to vector<16x128xf32>
    %73 = arith.maximumf %71, %72 : vector<16x128xf32>
    %c0_50 = arith.constant 0 : index
    %c0_51 = arith.constant 0 : index
    %74 = vector.load %arg25[%c0_50, %c0_51] : memref<16x128xf32, #tpu.memory_space<vmem>>, vector<16x128xf32>
    tpu.vector_store %arg25[%c0_50, %c0_51], %70 {strides = array<i32>} : memref<16x128xf32, #tpu.memory_space<vmem>>, vector<16x128xf32>,
    %c0_52 = arith.constant 0 : index
    %c0_53 = arith.constant 0 : index
    %75 = vector.load %arg26[%c0_52, %c0_53] : memref<16x128xf32, #tpu.memory_space<vmem>>, vector<16x128xf32>
    tpu.vector_store %arg26[%c0_52, %c0_53], %73 {strides = array<i32>} : memref<16x128xf32, #tpu.memory_space<vmem>>, vector<16x128xf32>,
    %c1_i32 = arith.constant 1 : i32
    %76 = arith.cmpi eq, %arg0, %c1_i32 : i32
    %77 = arith.extui %76 : i1 to i32
    %c0_i32_54 = arith.constant 0 : i32
    %78 = arith.cmpi ne, %77, %c0_i32_54 : i32
    scf.if %78 {
      %79 = arith.truncf %70 : vector<16x128xf32> to vector<16x128xbf16>
      %c0_55 = arith.constant 0 : index
      %c0_56 = arith.constant 0 : index
      %80 = vector.load %arg19[%c0_55, %c0_56] : memref<128x128xbf16, #tpu.memory_space<vmem>>, vector<128x128xbf16>
      %cst_57 = arith.constant dense<0.000000e+00> : vector<16x128xf32>
      %81 = tpu.matmul %79, %80, %cst_57 {dimension_numbers = #tpu.dot_dimension_numbers<[1], [0], [0], [1], [0, 0, 1, 1], [], []>} : vector<16x128xbf16>, vector<128x128xbf16>, vector<16x128xf32> -> vector<16x128xf32>
      %c0_58 = arith.constant 0 : index
      %c0_59 = arith.constant 0 : index
      %82 = vector.load %arg20[%c0_58, %c0_59] : memref<1x128xf32, #tpu.memory_space<vmem>>, vector<1x128xf32>
      %83 = vector.broadcast %82 : vector<1x128xf32> to vector<16x128xf32>
      %84 = arith.addf %81, %83 : vector<16x128xf32>
      %c0_60 = arith.constant 0 : index
      %c0_61 = arith.constant 0 : index
      %85 = vector.load %arg23[%c0_60, %c0_61] : memref<16x128xf32, #tpu.memory_space<vmem>>, vector<16x128xf32>
      tpu.vector_store %arg23[%c0_60, %c0_61], %84 {strides = array<i32>} : memref<16x128xf32, #tpu.memory_space<vmem>>, vector<16x128xf32>,
      %86 = arith.truncf %73 : vector<16x128xf32> to vector<16x128xbf16>
      %c0_62 = arith.constant 0 : index
      %c0_63 = arith.constant 0 : index
      %87 = vector.load %arg21[%c0_62, %c0_63] : memref<128x128xbf16, #tpu.memory_space<vmem>>, vector<128x128xbf16>
      %cst_64 = arith.constant dense<0.000000e+00> : vector<16x128xf32>
      %88 = tpu.matmul %86, %87, %cst_64 {dimension_numbers = #tpu.dot_dimension_numbers<[1], [0], [0], [1], [0, 0, 1, 1], [], []>} : vector<16x128xbf16>, vector<128x128xbf16>, vector<16x128xf32> -> vector<16x128xf32>
      %c0_65 = arith.constant 0 : index
      %c0_66 = arith.constant 0 : index
      %89 = vector.load %arg22[%c0_65, %c0_66] : memref<1x128xf32, #tpu.memory_space<vmem>>, vector<1x128xf32>
      %90 = vector.broadcast %89 : vector<1x128xf32> to vector<16x128xf32>
      %91 = arith.addf %88, %90 : vector<16x128xf32>
      %c0_67 = arith.constant 0 : index
      %c0_68 = arith.constant 0 : index
      %92 = vector.load %arg24[%c0_67, %c0_68] : memref<16x128xf32, #tpu.memory_space<vmem>>, vector<16x128xf32>
      tpu.vector_store %arg24[%c0_67, %c0_68], %91 {strides = array<i32>} : memref<16x128xf32, #tpu.memory_space<vmem>>, vector<16x128xf32>,
    } else {
    }
    return
  }
  func.func @transform_0(%arg0: i32) -> (i32, i32) {
    %c0_i32 = arith.constant 0 : i32
    %c0_i32_0 = arith.constant 0 : i32
    %c0_i32_1 = arith.constant 0 : i32
    return %c0_i32, %c0_i32_0 : i32, i32
  }
  func.func @transform_1(%arg0: i32) -> (i32, i32) {
    %c0_i32 = arith.constant 0 : i32
    %c0_i32_0 = arith.constant 0 : i32
    %c0_i32_1 = arith.constant 0 : i32
    return %c0_i32, %c0_i32_0 : i32, i32
  }
  func.func @transform_2(%arg0: i32) -> (i32, i32) {
    %c0_i32 = arith.constant 0 : i32
    %c0_i32_0 = arith.constant 0 : i32
    %c0_i32_1 = arith.constant 0 : i32
    return %c0_i32, %c0_i32_0 : i32, i32
  }
  func.func @transform_3(%arg0: i32) -> (i32, i32) {
    %c0_i32 = arith.constant 0 : i32
    %c0_i32_0 = arith.constant 0 : i32
    %c0_i32_1 = arith.constant 0 : i32
    return %c0_i32, %c0_i32_0 : i32, i32
  }
  func.func @transform_4(%arg0: i32) -> (i32, i32) {
    %c0_i32 = arith.constant 0 : i32
    %c0_i32_0 = arith.constant 0 : i32
    %c0_i32_1 = arith.constant 0 : i32
    return %c0_i32, %c0_i32_0 : i32, i32
  }
  func.func @transform_5(%arg0: i32) -> (i32, i32) {
    %c0_i32 = arith.constant 0 : i32
    %c0_i32_0 = arith.constant 0 : i32
    %c0_i32_1 = arith.constant 0 : i32
    return %c0_i32, %c0_i32_0 : i32, i32
  }
  func.func @transform_6(%arg0: i32) -> (i32, i32) {
    %c0_i32 = arith.constant 0 : i32
    %c0_i32_0 = arith.constant 0 : i32
    %c0_i32_1 = arith.constant 0 : i32
    return %c0_i32, %c0_i32_0 : i32, i32
  }
  func.func @transform_7(%arg0: i32) -> (i32, i32) {
    %c0_i32 = arith.constant 0 : i32
    %c0_i32_0 = arith.constant 0 : i32
    %c0_i32_1 = arith.constant 0 : i32
    return %c0_i32, %c0_i32_0 : i32, i32
  }
  func.func @transform_8(%arg0: i32) -> (i32, i32) {
    %c0_i32 = arith.constant 0 : i32
    %c0_i32_0 = arith.constant 0 : i32
    %c0_i32_1 = arith.constant 0 : i32
    return %c0_i32, %c0_i32_0 : i32, i32
  }
  func.func @transform_9(%arg0: i32) -> (i32, i32, i32) {
    %c0_i32 = arith.constant 0 : i32
    %c0_i32_0 = arith.constant 0 : i32
    %c0_i32_1 = arith.constant 0 : i32
    return %arg0, %c0_i32, %c0_i32_0 : i32, i32, i32
  }
  func.func @transform_10(%arg0: i32) -> (i32, i32, i32) {
    %c0_i32 = arith.constant 0 : i32
    %c0_i32_0 = arith.constant 0 : i32
    %c0_i32_1 = arith.constant 0 : i32
    return %arg0, %c0_i32, %c0_i32_0 : i32, i32, i32
  }
  func.func @transform_11(%arg0: i32) -> (i32, i32, i32) {
    %c0_i32 = arith.constant 0 : i32
    %c0_i32_0 = arith.constant 0 : i32
    %c0_i32_1 = arith.constant 0 : i32
    return %arg0, %c0_i32, %c0_i32_0 : i32, i32, i32
  }
  func.func @transform_12(%arg0: i32) -> (i32, i32, i32) {
    %c0_i32 = arith.constant 0 : i32
    %c0_i32_0 = arith.constant 0 : i32
    %c0_i32_1 = arith.constant 0 : i32
    return %arg0, %c0_i32, %c0_i32_0 : i32, i32, i32
  }
  func.func @transform_13(%arg0: i32) -> (i32, i32, i32) {
    %c0_i32 = arith.constant 0 : i32
    %c0_i32_0 = arith.constant 0 : i32
    %c0_i32_1 = arith.constant 0 : i32
    return %arg0, %c0_i32, %c0_i32_0 : i32, i32, i32
  }
  func.func @transform_14(%arg0: i32) -> (i32, i32, i32) {
    %c0_i32 = arith.constant 0 : i32
    %c0_i32_0 = arith.constant 0 : i32
    %c0_i32_1 = arith.constant 0 : i32
    return %arg0, %c0_i32, %c0_i32_0 : i32, i32, i32
  }
  func.func @transform_15(%arg0: i32) -> (i32, i32, i32) {
    %c0_i32 = arith.constant 0 : i32
    %c0_i32_0 = arith.constant 0 : i32
    %c0_i32_1 = arith.constant 0 : i32
    return %arg0, %c0_i32, %c0_i32_0 : i32, i32, i32
  }
  func.func @transform_16(%arg0: i32) -> (i32, i32, i32) {
    %c0_i32 = arith.constant 0 : i32
    %c0_i32_0 = arith.constant 0 : i32
    %c0_i32_1 = arith.constant 0 : i32
    return %arg0, %c0_i32, %c0_i32_0 : i32, i32, i32
  }
  func.func @transform_17(%arg0: i32) -> (i32, i32, i32) {
    %c0_i32 = arith.constant 0 : i32
    %c0_i32_0 = arith.constant 0 : i32
    %c0_i32_1 = arith.constant 0 : i32
    return %arg0, %c0_i32, %c0_i32_0 : i32, i32, i32
  }
  func.func @transform_18(%arg0: i32) -> (i32, i32) {
    %c0_i32 = arith.constant 0 : i32
    %c0_i32_0 = arith.constant 0 : i32
    %c0_i32_1 = arith.constant 0 : i32
    return %c0_i32, %c0_i32_0 : i32, i32
  }
  func.func @transform_19(%arg0: i32) -> (i32, i32) {
    %c0_i32 = arith.constant 0 : i32
    %c0_i32_0 = arith.constant 0 : i32
    %c0_i32_1 = arith.constant 0 : i32
    return %c0_i32, %c0_i32_0 : i32, i32
  }
  func.func @transform_20(%arg0: i32) -> (i32, i32) {
    %c0_i32 = arith.constant 0 : i32
    %c0_i32_0 = arith.constant 0 : i32
    %c0_i32_1 = arith.constant 0 : i32
    return %c0_i32, %c0_i32_0 : i32, i32
  }
  func.func @transform_21(%arg0: i32) -> (i32, i32) {
    %c0_i32 = arith.constant 0 : i32
    %c0_i32_0 = arith.constant 0 : i32
    %c0_i32_1 = arith.constant 0 : i32
    return %c0_i32, %c0_i32_0 : i32, i32
  }
  func.func @transform_22(%arg0: i32) -> (i32, i32) {
    %c0_i32 = arith.constant 0 : i32
    %c0_i32_0 = arith.constant 0 : i32
    %c0_i32_1 = arith.constant 0 : i32
    return %c0_i32, %c0_i32_0 : i32, i32
  }
  func.func @transform_23(%arg0: i32) -> (i32, i32) {
    %c0_i32 = arith.constant 0 : i32
    %c0_i32_0 = arith.constant 0 : i32
    %c0_i32_1 = arith.constant 0 : i32
    return %c0_i32, %c0_i32_0 : i32, i32
  }
}

</mosaic_0001>

<llo_original>
// kernel: tpu_custom_call.1
$region0: #{tpu_custom_call.1}
  #allocation0 [shape = 'u32[]', space=smem, size = 0x4, offset = 0x4, fixed_abs, tag = 'smem constant byte address 0x4 - core index']
  #allocation1 [shape = 'u32[144,128]{1,0:T(1,128)}', space=vmem, size = 0x12000, scoped, tag = 'internal scratch']
  #allocation2 [shape = 'f32[16,128]{1,0:T(8,128)}', space=vmem, size = 0x2000, scoped, tag = 'scratch operand']
  #allocation3 [shape = 'f32[16,128]{1,0:T(8,128)}', space=vmem, size = 0x2000, scoped, tag = 'scratch operand']
  %s0 = inlined_call_operand.hbm [shape: f32[16,128], index: 0, kind: input, shape index: {}]
  %s1 = inlined_call_operand.hbm [shape: f32[16,128], index: 1, kind: input, shape index: {}]
  %s2 = inlined_call_operand.hbm [shape: bf16[16,16], index: 2, kind: input, shape index: {}]
  %s3 = inlined_call_operand.hbm [shape: bf16[16,16], index: 3, kind: input, shape index: {}]
  %s4 = inlined_call_operand.hbm [shape: f32[16,16], index: 4, kind: input, shape index: {}]
  %s5 = inlined_call_operand.hbm [shape: bf16[128,128], index: 5, kind: input, shape index: {}]
  %s6 = inlined_call_operand.hbm [shape: f32[1,128], index: 6, kind: input, shape index: {}]
  %s7 = inlined_call_operand.hbm [shape: bf16[128,128], index: 7, kind: input, shape index: {}]
  %s8 = inlined_call_operand.hbm [shape: f32[1,128], index: 8, kind: input, shape index: {}]
  %s9 = inlined_call_operand.hbm [shape: bf16[2,256,128], index: 9, kind: input, shape index: {}]
  %s10 = inlined_call_operand.vmem [shape: f32[2,1,128], index: 10, kind: input, shape index: {}]
  %s11 = inlined_call_operand.hbm [shape: bf16[2,256,128], index: 11, kind: input, shape index: {}]
  %s12 = inlined_call_operand.vmem [shape: f32[2,1,128], index: 12, kind: input, shape index: {}]
  %s13 = inlined_call_operand.hbm [shape: bf16[2,128,128], index: 13, kind: input, shape index: {}]
  %s14 = inlined_call_operand.hbm [shape: f32[2,1,128], index: 14, kind: input, shape index: {}]
  %s15 = inlined_call_operand.hbm [shape: f32[2,1,128], index: 15, kind: input, shape index: {}]
  %s16 = inlined_call_operand.hbm [shape: f32[2,1,128], index: 16, kind: input, shape index: {}]
  %s17 = inlined_call_operand.hbm [shape: f32[2,1,128], index: 17, kind: input, shape index: {}]
  %s18 = inlined_call_operand.vmem [shape: bf16[128,128], index: 18, kind: input, shape index: {}]
  %s19 = inlined_call_operand.vmem [shape: f32[1,128], index: 19, kind: input, shape index: {}]
  %s20 = inlined_call_operand.hbm [shape: bf16[128,128], index: 20, kind: input, shape index: {}]
  %s21 = inlined_call_operand.vmem [shape: f32[1,128], index: 21, kind: input, shape index: {}]
  %s22 = inlined_call_operand.hbm [shape: f32[16,128], index: 22, kind: output, shape index: {0}]
  %s23 = inlined_call_operand.hbm [shape: f32[16,128], index: 23, kind: output, shape index: {1}]
  %24 = xla_tuple %s22, %s23
  %s25 = sld [smem:[#allocation0]]
  $region205: #{tpu_custom_call.1} parent=0
    _
  %s27 = ssub.s32 1, %s25
  %s28 = scalar_select 0, %s27, %s25
  $region1: #{tpu_custom_call.1} parent=0
    #allocation4 [shape = 'u8[8192]{0}', space=vmem, size = 0x2000, scoped, tag = 'input window, operand 0, single buffered']
    #allocation5 [shape = 's32[2]{0}', space=sflag, size = 0x8, scoped, tag = 'scoped memory for tpu_custom_call.1']
    #allocation6 [shape = 's32[2]{0}', space=sflag, size = 0x8, scoped, tag = 'scoped memory for tpu_custom_call.1']
    #allocation7 [shape = 'u8[8192]{0}', space=vmem, size = 0x2000, scoped, tag = 'input window, operand 1, single buffered']
    #allocation8 [shape = 's32[1]{0}', space=sflag, size = 0x4, scoped, tag = 'scoped memory for tpu_custom_call.1']
    #allocation9 [shape = 'u8[4096]{0}', space=vmem, size = 0x1000, scoped, tag = 'input window, operand 2, single buffered']
    #allocation10 [shape = 'u8[4096]{0}', space=vmem, size = 0x1000, scoped, tag = 'input window, operand 3, single buffered']
    #allocation11 [shape = 's32[1]{0}', space=sflag, size = 0x4, scoped, tag = 'scoped memory for tpu_custom_call.1']
    #allocation12 [shape = 'u8[8192]{0}', space=vmem, size = 0x2000, scoped, tag = 'input window, operand 4, single buffered']
    #allocation13 [shape = 'u8[32768]{0}', space=vmem, size = 0x8000, scoped, tag = 'input window, operand 5, single buffered']
    #allocation14 [shape = 's32[1]{0}', space=sflag, size = 0x4, scoped, tag = 'scoped memory for tpu_custom_call.1']
    #allocation15 [shape = 'u8[512]{0}', space=vmem, size = 0x400, scoped, tag = 'input window, operand 6, single buffered']
    #allocation16 [shape = 'u8[32768]{0}', space=vmem, size = 0x8000, scoped, tag = 'input window, operand 7, single buffered']
    #allocation17 [shape = 's32[1]{0}', space=sflag, size = 0x4, scoped, tag = 'scoped memory for tpu_custom_call.1']
    #allocation18 [shape = 'u8[512]{0}', space=vmem, size = 0x400, scoped, tag = 'input window, operand 8, single buffered']
    #allocation19 [shape = 'u8[131072]{0}', space=vmem, size = 0x20000, scoped, tag = 'input window, operand 9']
    #allocation20 [shape = 's32[2]{0}', space=sflag, size = 0x8, scoped, tag = 'scoped memory for tpu_custom_call.1']
    #allocation21 [shape = 'u8[131072]{0}', space=vmem, size = 0x20000, scoped, tag = 'input window, operand 11']
    #allocation22 [shape = 'u8[65536]{0}', space=vmem, size = 0x10000, scoped, tag = 'input window, operand 13']
    #allocation23 [shape = 's32[2]{0}', space=sflag, size = 0x8, scoped, tag = 'scoped memory for tpu_custom_call.1']
    #allocation24 [shape = 'u8[1024]{0}', space=vmem, size = 0x400, scoped, tag = 'input window, operand 14']
    #allocation25 [shape = 'u8[1024]{0}', space=vmem, size = 0x400, scoped, tag = 'input window, operand 15']
    #allocation26 [shape = 's32[2]{0}', space=sflag, size = 0x8, scoped, tag = 'scoped memory for tpu_custom_call.1']
    #allocation27 [shape = 'u8[1024]{0}', space=vmem, size = 0x400, scoped, tag = 'input window, operand 16']
    #allocation28 [shape = 'u8[1024]{0}', space=vmem, size = 0x400, scoped, tag = 'input window, operand 17']
    #allocation29 [shape = 's32[2]{0}', space=sflag, size = 0x8, scoped, tag = 'scoped memory for tpu_custom_call.1']
    #allocation30 [shape = 'u8[32768]{0}', space=vmem, size = 0x8000, scoped, tag = 'input window, operand 20, single buffered']
    #allocation31 [shape = 'u8[8192]{0}', space=vmem, size = 0x2000, scoped, tag = 'output window, operand 0, single buffered']
    #allocation32 [shape = 'u8[8192]{0}', space=vmem, size = 0x2000, scoped, tag = 'output window, operand 1, single buffered']
    #allocation33 [shape = 's32[1]{0}', space=sflag, size = 0x4, scoped, tag = 'scoped memory for tpu_custom_call.1']
    %29 = vsyncpa [#allocation5], 0
    %30 = vsyncpa [#allocation8], 0
    %31 = vsyncpa [#allocation11], 0
    %32 = vsyncpa [#allocation14], 0
    %33 = vsyncpa [#allocation17], 0
    %34 = vsyncpa [#allocation20], 0
    %s35 = scalar_lea.sflag [#allocation20], 1
    %36 = vsyncpa %s35, 0
    %37 = vsyncpa [#allocation23], 0
    %s38 = scalar_lea.sflag [#allocation23], 1
    %39 = vsyncpa %s38, 0
    %40 = vsyncpa [#allocation26], 0
    %s41 = scalar_lea.sflag [#allocation26], 1
    %42 = vsyncpa %s41, 0
    %43 = vsyncpa [#allocation29], 0
    %s44 = scalar_lea.sflag [#allocation29], 1
    %45 = vsyncpa %s44, 0
    %46 = vsyncpa [#allocation6], 0
    %47 = vsyncpa [#allocation33], 0
    loop: start=0, step=1, limit=4
    $region2: #{tpu_custom_call.1} parent=1 // loop_pre_header
      _
    $region3: #{tpu_custom_call.1} parent=1 // loop_header
      %s49 = sphi 0, %s53
      %p50 = scmp.ge.s32.totalorder %s49, 4
      %s57 = sphi 0, %s57
      %s59 = sphi 0, %s57
      %s60 = sphi 0, %s59
      %s74 = sphi 0, %s60
      %s78 = sphi 0, %s78
      %s80 = sphi 0, %s78
      %s81 = sphi 0, %s80
      %s95 = sphi 0, %s81
      %s99 = sphi 0, %s99
      %s101 = sphi 0, %s99
      %s102 = sphi 0, %s101
      %s116 = sphi 0, %s102
      %s120 = sphi 0, %s120
      %s122 = sphi 0, %s120
      %s123 = sphi 0, %s122
      %s137 = sphi 0, %s123
      %s141 = sphi 0, %s141
      %s143 = sphi 0, %s141
      %s144 = sphi 0, %s143
      %s158 = sphi 0, %s144
      %s162 = sphi 0, %s162
      %s164 = sphi 0, %s162
      %s165 = sphi 0, %s164
      %s179 = sphi 0, %s165
      %s183 = sphi 0, %s183
      %s185 = sphi 0, %s183
      %s186 = sphi 0, %s185
      %s200 = sphi 0, %s186
      %s204 = sphi 0, %s204
      %s206 = sphi 0, %s204
      %s207 = sphi 0, %s206
      %s221 = sphi 0, %s207
      %s225 = sphi 0, %s225
      %s227 = sphi 0, %s225
      %s228 = sphi 0, %s227
      %s242 = sphi 0, %s228
      %s248 = sphi 0, %s250
      %s251 = sphi 0, %s248
      %s252 = sphi 0, %s251
      %s268 = sphi 0, %s252
      %s274 = sphi 0, %s276
      %s277 = sphi 0, %s274
      %s278 = sphi 0, %s277
      %s294 = sphi 0, %s278
      %s300 = sphi 0, %s302
      %s303 = sphi 0, %s300
      %s304 = sphi 0, %s303
      %s320 = sphi 0, %s304
      %s326 = sphi 0, %s328
      %s329 = sphi 0, %s326
      %s330 = sphi 0, %s329
      %s346 = sphi 0, %s330
      %s352 = sphi 0, %s354
      %s355 = sphi 0, %s352
      %s356 = sphi 0, %s355
      %s372 = sphi 0, %s356
      %s378 = sphi 0, %s380
      %s381 = sphi 0, %s378
      %s382 = sphi 0, %s381
      %s398 = sphi 0, %s382
      %s404 = sphi 0, %s406
      %s407 = sphi 0, %s404
      %s408 = sphi 0, %s407
      %s424 = sphi 0, %s408
      %s430 = sphi 0, %s432
      %s433 = sphi 0, %s430
      %s434 = sphi 0, %s433
      %s450 = sphi 0, %s434
      %s456 = sphi 0, %s458
      %s459 = sphi 0, %s456
      %s460 = sphi 0, %s459
      %s476 = sphi 0, %s460
      %s480 = sphi 0, %s480
      %s482 = sphi 0, %s480
      %s483 = sphi 0, %s482
      %s497 = sphi 0, %s483
      %s501 = sphi 0, %s501
      %s503 = sphi 0, %s501
      %s504 = sphi 0, %s503
      %s518 = sphi 0, %s504
      %s522 = sphi 0, %s522
      %s524 = sphi 0, %s522
      %s525 = sphi 0, %s524
      %s539 = sphi 0, %s525
      %s543 = sphi 0, %s543
      %s545 = sphi 0, %s543
      %s546 = sphi 0, %s545
      %s560 = sphi 0, %s546
      %s564 = sphi 0, %s564
      %s566 = sphi 0, %s564
      %s567 = sphi 0, %s566
      %s581 = sphi 0, %s567
      %s585 = sphi 0, %s585
      %s587 = sphi 0, %s585
      %s588 = sphi 0, %s587
      %s602 = sphi 0, %s588
    $region4: #{tpu_custom_call.1} parent=1 // loop_header_branch
      %52 = sbr.rel (%p50) target = $region8
    $region5: #{tpu_custom_call.1} parent=1 // loop_body
      %s54 = ssub.s32 %s49, 1
      %s55 = ssub.s32 %s49, 2
      %s56 = sadd.s32 %s49, 1
      %s58 = sadd.s32 %s57, 1
      %p61 = scmp.eq.s32.totalorder %s49, 1
      %p62 = scmp.ne.s32.totalorder %s57, %s59
      %p63 = scmp.eq.s32.totalorder %s49, 0
      %p64 = por %p62, %p63
      %p65 = scmp.ne.s32.totalorder %s57, %s59
      %p66 = scmp.eq.s32.totalorder %s54, 1
      %p67 = por %p65, %p66
      %p68 = scmp.ne.s32.totalorder %s59, %s60
      %p69 = scmp.eq.s32.totalorder %s54, 0
      %p70 = por %p68, %p69
      %p71 = scmp.ne.s32.totalorder %s59, %s60
      %p72 = scmp.eq.s32.totalorder %s55, 1
      %p73 = por %p71, %p72
      %p75 = scmp.ne.s32.totalorder %s60, %s74
      %p76 = scmp.eq.s32.totalorder %s55, 0
      %p77 = por %p75, %p76
      %s79 = sadd.s32 %s78, 1
      %p82 = scmp.eq.s32.totalorder %s49, 1
      %p83 = scmp.ne.s32.totalorder %s78, %s80
      %p84 = scmp.eq.s32.totalorder %s49, 0
      %p85 = por %p83, %p84
      %p86 = scmp.ne.s32.totalorder %s78, %s80
      %p87 = scmp.eq.s32.totalorder %s54, 1
      %p88 = por %p86, %p87
      %p89 = scmp.ne.s32.totalorder %s80, %s81
      %p90 = scmp.eq.s32.totalorder %s54, 0
      %p91 = por %p89, %p90
      %p92 = scmp.ne.s32.totalorder %s80, %s81
      %p93 = scmp.eq.s32.totalorder %s55, 1
      %p94 = por %p92, %p93
      %p96 = scmp.ne.s32.totalorder %s81, %s95
      %p97 = scmp.eq.s32.totalorder %s55, 0
      %p98 = por %p96, %p97
      %s100 = sadd.s32 %s99, 1
      %p103 = scmp.eq.s32.totalorder %s49, 1
      %p104 = scmp.ne.s32.totalorder %s99, %s101
      %p105 = scmp.eq.s32.totalorder %s49, 0
      %p106 = por %p104, %p105
      %p107 = scmp.ne.s32.totalorder %s99, %s101
      %p108 = scmp.eq.s32.totalorder %s54, 1
      %p109 = por %p107, %p108
      %p110 = scmp.ne.s32.totalorder %s101, %s102
      %p111 = scmp.eq.s32.totalorder %s54, 0
      %p112 = por %p110, %p111
      %p113 = scmp.ne.s32.totalorder %s101, %s102
      %p114 = scmp.eq.s32.totalorder %s55, 1
      %p115 = por %p113, %p114
      %p117 = scmp.ne.s32.totalorder %s102, %s116
      %p118 = scmp.eq.s32.totalorder %s55, 0
      %p119 = por %p117, %p118
      %s121 = sadd.s32 %s120, 1
      %p124 = scmp.eq.s32.totalorder %s49, 1
      %p125 = scmp.ne.s32.totalorder %s120, %s122
      %p126 = scmp.eq.s32.totalorder %s49, 0
      %p127 = por %p125, %p126
      %p128 = scmp.ne.s32.totalorder %s120, %s122
      %p129 = scmp.eq.s32.totalorder %s54, 1
      %p130 = por %p128, %p129
      %p131 = scmp.ne.s32.totalorder %s122, %s123
      %p132 = scmp.eq.s32.totalorder %s54, 0
      %p133 = por %p131, %p132
      %p134 = scmp.ne.s32.totalorder %s122, %s123
      %p135 = scmp.eq.s32.totalorder %s55, 1
      %p136 = por %p134, %p135
      %p138 = scmp.ne.s32.totalorder %s123, %s137
      %p139 = scmp.eq.s32.totalorder %s55, 0
      %p140 = por %p138, %p139
      %s142 = sadd.s32 %s141, 1
      %p145 = scmp.eq.s32.totalorder %s49, 1
      %p146 = scmp.ne.s32.totalorder %s141, %s143
      %p147 = scmp.eq.s32.totalorder %s49, 0
      %p148 = por %p146, %p147
      %p149 = scmp.ne.s32.totalorder %s141, %s143
      %p150 = scmp.eq.s32.totalorder %s54, 1
      %p151 = por %p149, %p150
      %p152 = scmp.ne.s32.totalorder %s143, %s144
      %p153 = scmp.eq.s32.totalorder %s54, 0
      %p154 = por %p152, %p153
      %p155 = scmp.ne.s32.totalorder %s143, %s144
      %p156 = scmp.eq.s32.totalorder %s55, 1
      %p157 = por %p155, %p156
      %p159 = scmp.ne.s32.totalorder %s144, %s158
      %p160 = scmp.eq.s32.totalorder %s55, 0
      %p161 = por %p159, %p160
      %s163 = sadd.s32 %s162, 1
      %p166 = scmp.eq.s32.totalorder %s49, 1
      %p167 = scmp.ne.s32.totalorder %s162, %s164
      %p168 = scmp.eq.s32.totalorder %s49, 0
      %p169 = por %p167, %p168
      %p170 = scmp.ne.s32.totalorder %s162, %s164
      %p171 = scmp.eq.s32.totalorder %s54, 1
      %p172 = por %p170, %p171
      %p173 = scmp.ne.s32.totalorder %s164, %s165
      %p174 = scmp.eq.s32.totalorder %s54, 0
      %p175 = por %p173, %p174
      %p176 = scmp.ne.s32.totalorder %s164, %s165
      %p177 = scmp.eq.s32.totalorder %s55, 1
      %p178 = por %p176, %p177
      %p180 = scmp.ne.s32.totalorder %s165, %s179
      %p181 = scmp.eq.s32.totalorder %s55, 0
      %p182 = por %p180, %p181
      %s184 = sadd.s32 %s183, 1
      %p187 = scmp.eq.s32.totalorder %s49, 1
      %p188 = scmp.ne.s32.totalorder %s183, %s185
      %p189 = scmp.eq.s32.totalorder %s49, 0
      %p190 = por %p188, %p189
      %p191 = scmp.ne.s32.totalorder %s183, %s185
      %p192 = scmp.eq.s32.totalorder %s54, 1
      %p193 = por %p191, %p192
      %p194 = scmp.ne.s32.totalorder %s185, %s186
      %p195 = scmp.eq.s32.totalorder %s54, 0
      %p196 = por %p194, %p195
      %p197 = scmp.ne.s32.totalorder %s185, %s186
      %p198 = scmp.eq.s32.totalorder %s55, 1
      %p199 = por %p197, %p198
      %p201 = scmp.ne.s32.totalorder %s186, %s200
      %p202 = scmp.eq.s32.totalorder %s55, 0
      %p203 = por %p201, %p202
      %s205 = sadd.s32 %s204, 1
      %p208 = scmp.eq.s32.totalorder %s49, 1
      %p209 = scmp.ne.s32.totalorder %s204, %s206
      %p210 = scmp.eq.s32.totalorder %s49, 0
      %p211 = por %p209, %p210
      %p212 = scmp.ne.s32.totalorder %s204, %s206
      %p213 = scmp.eq.s32.totalorder %s54, 1
      %p214 = por %p212, %p213
      %p215 = scmp.ne.s32.totalorder %s206, %s207
      %p216 = scmp.eq.s32.totalorder %s54, 0
      %p217 = por %p215, %p216
      %p218 = scmp.ne.s32.totalorder %s206, %s207
      %p219 = scmp.eq.s32.totalorder %s55, 1
      %p220 = por %p218, %p219
      %p222 = scmp.ne.s32.totalorder %s207, %s221
      %p223 = scmp.eq.s32.totalorder %s55, 0
      %p224 = por %p222, %p223
      %s226 = sadd.s32 %s225, 1
      %p229 = scmp.eq.s32.totalorder %s49, 1
      %p230 = scmp.ne.s32.totalorder %s225, %s227
      %p231 = scmp.eq.s32.totalorder %s49, 0
      %p232 = por %p230, %p231
      %p233 = scmp.ne.s32.totalorder %s225, %s227
      %p234 = scmp.eq.s32.totalorder %s54, 1
      %p235 = por %p233, %p234
      %p236 = scmp.ne.s32.totalorder %s227, %s228
      %p237 = scmp.eq.s32.totalorder %s54, 0
      %p238 = por %p236, %p237
      %p239 = scmp.ne.s32.totalorder %s227, %s228
      %p240 = scmp.eq.s32.totalorder %s55, 1
      %p241 = por %p239, %p240
      %p243 = scmp.ne.s32.totalorder %s228, %s242
      %p244 = scmp.eq.s32.totalorder %s55, 0
      %p245 = por %p243, %p244
      %s246 = ssub.s32 %s49, %s56
      %p247 = scmp.eq.s32.totalorder %s246, 0
      %s249 = sadd.s32 %s248, 1
      %s250 = scalar_select %p247, %s248, %s249
      %p253 = pneg %p247
      %p254 = scmp.eq.s32.totalorder %s49, 1
      %p255 = por %p253, %p254
      %p256 = scmp.ne.s32.totalorder %s248, %s251
      %p257 = scmp.eq.s32.totalorder %s49, 0
      %p258 = por %p256, %p257
      %p259 = scmp.ne.s32.totalorder %s248, %s251
      %p260 = scmp.eq.s32.totalorder %s54, 1
      %p261 = por %p259, %p260
      %p262 = scmp.ne.s32.totalorder %s251, %s252
      %p263 = scmp.eq.s32.totalorder %s54, 0
      %p264 = por %p262, %p263
      %p265 = scmp.ne.s32.totalorder %s251, %s252
      %p266 = scmp.eq.s32.totalorder %s55, 1
      %p267 = por %p265, %p266
      %p269 = scmp.ne.s32.totalorder %s252, %s268
      %p270 = scmp.eq.s32.totalorder %s55, 0
      %p271 = por %p269, %p270
      %s272 = ssub.s32 %s49, %s56
      %p273 = scmp.eq.s32.totalorder %s272, 0
      %s275 = sadd.s32 %s274, 1
      %s276 = scalar_select %p273, %s274, %s275
      %p279 = pneg %p273
      %p280 = scmp.eq.s32.totalorder %s49, 1
      %p281 = por %p279, %p280
      %p282 = scmp.ne.s32.totalorder %s274, %s277
      %p283 = scmp.eq.s32.totalorder %s49, 0
      %p284 = por %p282, %p283
      %p285 = scmp.ne.s32.totalorder %s274, %s277
      %p286 = scmp.eq.s32.totalorder %s54, 1
      %p287 = por %p285, %p286
      %p288 = scmp.ne.s32.totalorder %s277, %s278
      %p289 = scmp.eq.s32.totalorder %s54, 0
      %p290 = por %p288, %p289
      %p291 = scmp.ne.s32.totalorder %s277, %s278
      %p292 = scmp.eq.s32.totalorder %s55, 1
      %p293 = por %p291, %p292
      %p295 = scmp.ne.s32.totalorder %s278, %s294
      %p296 = scmp.eq.s32.totalorder %s55, 0
      %p297 = por %p295, %p296
      %s298 = ssub.s32 %s49, %s56
      %p299 = scmp.eq.s32.totalorder %s298, 0
      %s301 = sadd.s32 %s300, 1
      %s302 = scalar_select %p299, %s300, %s301
      %p305 = pneg %p299
      %p306 = scmp.eq.s32.totalorder %s49, 1
      %p307 = por %p305, %p306
      %p308 = scmp.ne.s32.totalorder %s300, %s303
      %p309 = scmp.eq.s32.totalorder %s49, 0
      %p310 = por %p308, %p309
      %p311 = scmp.ne.s32.totalorder %s300, %s303
      %p312 = scmp.eq.s32.totalorder %s54, 1
      %p313 = por %p311, %p312
      %p314 = scmp.ne.s32.totalorder %s303, %s304
      %p315 = scmp.eq.s32.totalorder %s54, 0
      %p316 = por %p314, %p315
      %p317 = scmp.ne.s32.totalorder %s303, %s304
      %p318 = scmp.eq.s32.totalorder %s55, 1
      %p319 = por %p317, %p318
      %p321 = scmp.ne.s32.totalorder %s304, %s320
      %p322 = scmp.eq.s32.totalorder %s55, 0
      %p323 = por %p321, %p322
      %s324 = ssub.s32 %s49, %s56
      %p325 = scmp.eq.s32.totalorder %s324, 0
      %s327 = sadd.s32 %s326, 1
      %s328 = scalar_select %p325, %s326, %s327
      %p331 = pneg %p325
      %p332 = scmp.eq.s32.totalorder %s49, 1
      %p333 = por %p331, %p332
      %p334 = scmp.ne.s32.totalorder %s326, %s329
      %p335 = scmp.eq.s32.totalorder %s49, 0
      %p336 = por %p334, %p335
      %p337 = scmp.ne.s32.totalorder %s326, %s329
      %p338 = scmp.eq.s32.totalorder %s54, 1
      %p339 = por %p337, %p338
      %p340 = scmp.ne.s32.totalorder %s329, %s330
      %p341 = scmp.eq.s32.totalorder %s54, 0
      %p342 = por %p340, %p341
      %p343 = scmp.ne.s32.totalorder %s329, %s330
      %p344 = scmp.eq.s32.totalorder %s55, 1
      %p345 = por %p343, %p344
      %p347 = scmp.ne.s32.totalorder %s330, %s346
      %p348 = scmp.eq.s32.totalorder %s55, 0
      %p349 = por %p347, %p348
      %s350 = ssub.s32 %s49, %s56
      %p351 = scmp.eq.s32.totalorder %s350, 0
      %s353 = sadd.s32 %s352, 1
      %s354 = scalar_select %p351, %s352, %s353
      %p357 = pneg %p351
      %p358 = scmp.eq.s32.totalorder %s49, 1
      %p359 = por %p357, %p358
      %p360 = scmp.ne.s32.totalorder %s352, %s355
      %p361 = scmp.eq.s32.totalorder %s49, 0
      %p362 = por %p360, %p361
      %p363 = scmp.ne.s32.totalorder %s352, %s355
      %p364 = scmp.eq.s32.totalorder %s54, 1
      %p365 = por %p363, %p364
      %p366 = scmp.ne.s32.totalorder %s355, %s356
      %p367 = scmp.eq.s32.totalorder %s54, 0
      %p368 = por %p366, %p367
      %p369 = scmp.ne.s32.totalorder %s355, %s356
      %p370 = scmp.eq.s32.totalorder %s55, 1
      %p371 = por %p369, %p370
      %p373 = scmp.ne.s32.totalorder %s356, %s372
      %p374 = scmp.eq.s32.totalorder %s55, 0
      %p375 = por %p373, %p374
      %s376 = ssub.s32 %s49, %s56
      %p377 = scmp.eq.s32.totalorder %s376, 0
      %s379 = sadd.s32 %s378, 1
      %s380 = scalar_select %p377, %s378, %s379
      %p383 = pneg %p377
      %p384 = scmp.eq.s32.totalorder %s49, 1
      %p385 = por %p383, %p384
      %p386 = scmp.ne.s32.totalorder %s378, %s381
      %p387 = scmp.eq.s32.totalorder %s49, 0
      %p388 = por %p386, %p387
      %p389 = scmp.ne.s32.totalorder %s378, %s381
      %p390 = scmp.eq.s32.totalorder %s54, 1
      %p391 = por %p389, %p390
      %p392 = scmp.ne.s32.totalorder %s381, %s382
      %p393 = scmp.eq.s32.totalorder %s54, 0
      %p394 = por %p392, %p393
      %p395 = scmp.ne.s32.totalorder %s381, %s382
      %p396 = scmp.eq.s32.totalorder %s55, 1
      %p397 = por %p395, %p396
      %p399 = scmp.ne.s32.totalorder %s382, %s398
      %p400 = scmp.eq.s32.totalorder %s55, 0
      %p401 = por %p399, %p400
      %s402 = ssub.s32 %s49, %s56
      %p403 = scmp.eq.s32.totalorder %s402, 0
      %s405 = sadd.s32 %s404, 1
      %s406 = scalar_select %p403, %s404, %s405
      %p409 = pneg %p403
      %p410 = scmp.eq.s32.totalorder %s49, 1
      %p411 = por %p409, %p410
      %p412 = scmp.ne.s32.totalorder %s404, %s407
      %p413 = scmp.eq.s32.totalorder %s49, 0
      %p414 = por %p412, %p413
      %p415 = scmp.ne.s32.totalorder %s404, %s407
      %p416 = scmp.eq.s32.totalorder %s54, 1
      %p417 = por %p415, %p416
      %p418 = scmp.ne.s32.totalorder %s407, %s408
      %p419 = scmp.eq.s32.totalorder %s54, 0
      %p420 = por %p418, %p419
      %p421 = scmp.ne.s32.totalorder %s407, %s408
      %p422 = scmp.eq.s32.totalorder %s55, 1
      %p423 = por %p421, %p422
      %p425 = scmp.ne.s32.totalorder %s408, %s424
      %p426 = scmp.eq.s32.totalorder %s55, 0
      %p427 = por %p425, %p426
      %s428 = ssub.s32 %s49, %s56
      %p429 = scmp.eq.s32.totalorder %s428, 0
      %s431 = sadd.s32 %s430, 1
      %s432 = scalar_select %p429, %s430, %s431
      %p435 = pneg %p429
      %p436 = scmp.eq.s32.totalorder %s49, 1
      %p437 = por %p435, %p436
      %p438 = scmp.ne.s32.totalorder %s430, %s433
      %p439 = scmp.eq.s32.totalorder %s49, 0
      %p440 = por %p438, %p439
      %p441 = scmp.ne.s32.totalorder %s430, %s433
      %p442 = scmp.eq.s32.totalorder %s54, 1
      %p443 = por %p441, %p442
      %p444 = scmp.ne.s32.totalorder %s433, %s434
      %p445 = scmp.eq.s32.totalorder %s54, 0
      %p446 = por %p444, %p445
      %p447 = scmp.ne.s32.totalorder %s433, %s434
      %p448 = scmp.eq.s32.totalorder %s55, 1
      %p449 = por %p447, %p448
      %p451 = scmp.ne.s32.totalorder %s434, %s450
      %p452 = scmp.eq.s32.totalorder %s55, 0
      %p453 = por %p451, %p452
      %s454 = ssub.s32 %s49, %s56
      %p455 = scmp.eq.s32.totalorder %s454, 0
      %s457 = sadd.s32 %s456, 1
      %s458 = scalar_select %p455, %s456, %s457
      %p461 = pneg %p455
      %p462 = scmp.eq.s32.totalorder %s49, 1
      %p463 = por %p461, %p462
      %p464 = scmp.ne.s32.totalorder %s456, %s459
      %p465 = scmp.eq.s32.totalorder %s49, 0
      %p466 = por %p464, %p465
      %p467 = scmp.ne.s32.totalorder %s456, %s459
      %p468 = scmp.eq.s32.totalorder %s54, 1
      %p469 = por %p467, %p468
      %p470 = scmp.ne.s32.totalorder %s459, %s460
      %p471 = scmp.eq.s32.totalorder %s54, 0
      %p472 = por %p470, %p471
      %p473 = scmp.ne.s32.totalorder %s459, %s460
      %p474 = scmp.eq.s32.totalorder %s55, 1
      %p475 = por %p473, %p474
      %p477 = scmp.ne.s32.totalorder %s460, %s476
      %p478 = scmp.eq.s32.totalorder %s55, 0
      %p479 = por %p477, %p478
      %s481 = sadd.s32 %s480, 1
      %p484 = scmp.eq.s32.totalorder %s49, 1
      %p485 = scmp.ne.s32.totalorder %s480, %s482
      %p486 = scmp.eq.s32.totalorder %s49, 0
      %p487 = por %p485, %p486
      %p488 = scmp.ne.s32.totalorder %s480, %s482
      %p489 = scmp.eq.s32.totalorder %s54, 1
      %p490 = por %p488, %p489
      %p491 = scmp.ne.s32.totalorder %s482, %s483
      %p492 = scmp.eq.s32.totalorder %s54, 0
      %p493 = por %p491, %p492
      %p494 = scmp.ne.s32.totalorder %s482, %s483
      %p495 = scmp.eq.s32.totalorder %s55, 1
      %p496 = por %p494, %p495
      %p498 = scmp.ne.s32.totalorder %s483, %s497
      %p499 = scmp.eq.s32.totalorder %s55, 0
      %p500 = por %p498, %p499
      %s502 = sadd.s32 %s501, 1
      %p505 = scmp.eq.s32.totalorder %s49, 1
      %p506 = scmp.ne.s32.totalorder %s501, %s503
      %p507 = scmp.eq.s32.totalorder %s49, 0
      %p508 = por %p506, %p507
      %p509 = scmp.ne.s32.totalorder %s501, %s503
      %p510 = scmp.eq.s32.totalorder %s54, 1
      %p511 = por %p509, %p510
      %p512 = scmp.ne.s32.totalorder %s503, %s504
      %p513 = scmp.eq.s32.totalorder %s54, 0
      %p514 = por %p512, %p513
      %p515 = scmp.ne.s32.totalorder %s503, %s504
      %p516 = scmp.eq.s32.totalorder %s55, 1
      %p517 = por %p515, %p516
      %p519 = scmp.ne.s32.totalorder %s504, %s518
      %p520 = scmp.eq.s32.totalorder %s55, 0
      %p521 = por %p519, %p520
      %s523 = sadd.s32 %s522, 1
      %p526 = scmp.eq.s32.totalorder %s49, 1
      %p527 = scmp.ne.s32.totalorder %s522, %s524
      %p528 = scmp.eq.s32.totalorder %s49, 0
      %p529 = por %p527, %p528
      %p530 = scmp.ne.s32.totalorder %s522, %s524
      %p531 = scmp.eq.s32.totalorder %s54, 1
      %p532 = por %p530, %p531
      %p533 = scmp.ne.s32.totalorder %s524, %s525
      %p534 = scmp.eq.s32.totalorder %s54, 0
      %p535 = por %p533, %p534
      %p536 = scmp.ne.s32.totalorder %s524, %s525
      %p537 = scmp.eq.s32.totalorder %s55, 1
      %p538 = por %p536, %p537
      %p540 = scmp.ne.s32.totalorder %s525, %s539
      %p541 = scmp.eq.s32.totalorder %s55, 0
      %p542 = por %p540, %p541
      %s544 = sadd.s32 %s543, 1
      %p547 = scmp.eq.s32.totalorder %s49, 1
      %p548 = scmp.ne.s32.totalorder %s543, %s545
      %p549 = scmp.eq.s32.totalorder %s49, 0
      %p550 = por %p548, %p549
      %p551 = scmp.ne.s32.totalorder %s543, %s545
      %p552 = scmp.eq.s32.totalorder %s54, 1
      %p553 = por %p551, %p552
      %p554 = scmp.ne.s32.totalorder %s545, %s546
      %p555 = scmp.eq.s32.totalorder %s54, 0
      %p556 = por %p554, %p555
      %p557 = scmp.ne.s32.totalorder %s545, %s546
      %p558 = scmp.eq.s32.totalorder %s55, 1
      %p559 = por %p557, %p558
      %p561 = scmp.ne.s32.totalorder %s546, %s560
      %p562 = scmp.eq.s32.totalorder %s55, 0
      %p563 = por %p561, %p562
      %s565 = sadd.s32 %s564, 1
      %p568 = scmp.eq.s32.totalorder %s49, 1
      %p569 = scmp.ne.s32.totalorder %s564, %s566
      %p570 = scmp.eq.s32.totalorder %s49, 0
      %p571 = por %p569, %p570
      %p572 = scmp.ne.s32.totalorder %s564, %s566
      %p573 = scmp.eq.s32.totalorder %s54, 1
      %p574 = por %p572, %p573
      %p575 = scmp.ne.s32.totalorder %s566, %s567
      %p576 = scmp.eq.s32.totalorder %s54, 0
      %p577 = por %p575, %p576
      %p578 = scmp.ne.s32.totalorder %s566, %s567
      %p579 = scmp.eq.s32.totalorder %s55, 1
      %p580 = por %p578, %p579
      %p582 = scmp.ne.s32.totalorder %s567, %s581
      %p583 = scmp.eq.s32.totalorder %s55, 0
      %p584 = por %p582, %p583
      %s586 = sadd.s32 %s585, 1
      %p589 = scmp.eq.s32.totalorder %s49, 1
      %p590 = scmp.ne.s32.totalorder %s585, %s587
      %p591 = scmp.eq.s32.totalorder %s49, 0
      %p592 = por %p590, %p591
      %p593 = scmp.ne.s32.totalorder %s585, %s587
      %p594 = scmp.eq.s32.totalorder %s54, 1
      %p595 = por %p593, %p594
      %p596 = scmp.ne.s32.totalorder %s587, %s588
      %p597 = scmp.eq.s32.totalorder %s54, 0
      %p598 = por %p596, %p597
      %p599 = scmp.ne.s32.totalorder %s587, %s588
      %p600 = scmp.eq.s32.totalorder %s55, 1
      %p601 = por %p599, %p600
      %p603 = scmp.ne.s32.totalorder %s588, %s602
      %p604 = scmp.eq.s32.totalorder %s55, 0
      %p605 = por %p603, %p604
      %p606 = scmp.le.s32.totalorder 1, %s49
      %p607 = scmp.lt.s32.totalorder %s49, 3
      %p608 = pnand %p606, %p607
      %p609 = pneg %p608
      // Predicated region
      $region9: #{tpu_custom_call.1} parent=5 // pred_check
        _
      $region10: #{tpu_custom_call.1} parent=5 // pred_check_branch
        %611 = sbr.rel (%p608) target = $region12
      $region11: #{tpu_custom_call.1} parent=5 // pred_region
        %s612 = ssub.s32 %s49, 1
        // Predicated region
        $region13: #{tpu_custom_call.1} parent=11 // pred_check
          %p613 = pneg %p70
        $region14: #{tpu_custom_call.1} parent=11 // pred_check_branch
          %615 = sbr.rel (%p613) target = $region16
        $region15: #{tpu_custom_call.1} parent=11 // pred_region
          %s617 = ssub.s32 256, 256
          %618 = vsyncadd [#allocation5], %s617
          %s619 = sshll.u32 [#allocation4], 4
          %s620 = int_to_ptr.vmem [resolvable:$true] %s619
          %625 = dma.hbm_to_vmem [thread:$0]  %s0, 256, %s620, [#allocation5], 128, 128, 8
        $region16: #{tpu_custom_call.1} parent=11 // pred_fallthru
          _
        // Predicated region
        $region17: #{tpu_custom_call.1} parent=11 // pred_check
          %p626 = pneg %p91
        $region18: #{tpu_custom_call.1} parent=11 // pred_check_branch
          %628 = sbr.rel (%p626) target = $region20
        $region19: #{tpu_custom_call.1} parent=11 // pred_region
          %s630 = ssub.s32 256, 256
          %631 = vsyncadd [#allocation8], %s630
          %s632 = sshll.u32 [#allocation7], 4
          %s633 = int_to_ptr.vmem [resolvable:$true] %s632
          %638 = dma.hbm_to_vmem [thread:$0]  %s1, 256, %s633, [#allocation8], 128, 128, 8
        $region20: #{tpu_custom_call.1} parent=11 // pred_fallthru
          _
        // Predicated region
        $region21: #{tpu_custom_call.1} parent=11 // pred_check
          %p639 = pneg %p112
        $region22: #{tpu_custom_call.1} parent=11 // pred_check_branch
          %641 = sbr.rel (%p639) target = $region24
        $region23: #{tpu_custom_call.1} parent=11 // pred_region
          %s643 = ssub.s32 128, 128
          %644 = vsyncadd [#allocation8], %s643
          %s645 = sshll.u32 [#allocation9], 4
          %s646 = int_to_ptr.vmem [resolvable:$true] %s645
          %651 = dma.hbm_to_vmem [thread:$0]  %s2, 128, %s646, [#allocation8], 64, 64, 4
        $region24: #{tpu_custom_call.1} parent=11 // pred_fallthru
          _
        // Predicated region
        $region25: #{tpu_custom_call.1} parent=11 // pred_check
          %p652 = pneg %p133
        $region26: #{tpu_custom_call.1} parent=11 // pred_check_branch
          %654 = sbr.rel (%p652) target = $region28
        $region27: #{tpu_custom_call.1} parent=11 // pred_region
          %s656 = ssub.s32 128, 128
          %657 = vsyncadd [#allocation11], %s656
          %s658 = sshll.u32 [#allocation10], 4
          %s659 = int_to_ptr.vmem [resolvable:$true] %s658
          %664 = dma.hbm_to_vmem [thread:$0]  %s3, 128, %s659, [#allocation11], 64, 64, 4
        $region28: #{tpu_custom_call.1} parent=11 // pred_fallthru
          _
        // Predicated region
        $region29: #{tpu_custom_call.1} parent=11 // pred_check
          %p665 = pneg %p154
        $region30: #{tpu_custom_call.1} parent=11 // pred_check_branch
          %667 = sbr.rel (%p665) target = $region32
        $region31: #{tpu_custom_call.1} parent=11 // pred_region
          %s669 = ssub.s32 256, 256
          %670 = vsyncadd [#allocation11], %s669
          %s671 = sshll.u32 [#allocation12], 4
          %s672 = int_to_ptr.vmem [resolvable:$true] %s671
          %677 = dma.hbm_to_vmem [thread:$0]  %s4, 256, %s672, [#allocation11], 128, 128, 8
        $region32: #{tpu_custom_call.1} parent=11 // pred_fallthru
          _
        // Predicated region
        $region33: #{tpu_custom_call.1} parent=11 // pred_check
          %p678 = pneg %p175
        $region34: #{tpu_custom_call.1} parent=11 // pred_check_branch
          %680 = sbr.rel (%p678) target = $region36
        $region35: #{tpu_custom_call.1} parent=11 // pred_region
          %s682 = ssub.s32 1024, 1024
          %683 = vsyncadd [#allocation14], %s682
          %s684 = sshll.u32 [#allocation13], 4
          %s685 = int_to_ptr.vmem [resolvable:$true] %s684
          %690 = dma.hbm_to_vmem [thread:$0]  %s5, 1024, %s685, [#allocation14], 64, 64, 4
        $region36: #{tpu_custom_call.1} parent=11 // pred_fallthru
          _
        // Predicated region
        $region37: #{tpu_custom_call.1} parent=11 // pred_check
          %p691 = pneg %p196
        $region38: #{tpu_custom_call.1} parent=11 // pred_check_branch
          %693 = sbr.rel (%p691) target = $region40
        $region39: #{tpu_custom_call.1} parent=11 // pred_region
          %s695 = ssub.s32 16, 16
          %696 = vsyncadd [#allocation14], %s695
          %s698 = sshll.u32 [#allocation15], 4
          %s699 = int_to_ptr.vmem [resolvable:$true] %s698
          %701 = dma.hbm_to_vmem [thread:$0]  %s6, 16, %s699, [#allocation14]
        $region40: #{tpu_custom_call.1} parent=11 // pred_fallthru
          _
        // Predicated region
        $region41: #{tpu_custom_call.1} parent=11 // pred_check
          %p702 = pneg %p217
        $region42: #{tpu_custom_call.1} parent=11 // pred_check_branch
          %704 = sbr.rel (%p702) target = $region44
        $region43: #{tpu_custom_call.1} parent=11 // pred_region
          %s706 = ssub.s32 1024, 1024
          %707 = vsyncadd [#allocation17], %s706
          %s708 = sshll.u32 [#allocation16], 4
          %s709 = int_to_ptr.vmem [resolvable:$true] %s708
          %714 = dma.hbm_to_vmem [thread:$0]  %s7, 1024, %s709, [#allocation17], 64, 64, 4
        $region44: #{tpu_custom_call.1} parent=11 // pred_fallthru
          _
        // Predicated region
        $region45: #{tpu_custom_call.1} parent=11 // pred_check
          %p715 = pneg %p238
        $region46: #{tpu_custom_call.1} parent=11 // pred_check_branch
          %717 = sbr.rel (%p715) target = $region48
        $region47: #{tpu_custom_call.1} parent=11 // pred_region
          %s719 = ssub.s32 16, 16
          %720 = vsyncadd [#allocation17], %s719
          %s722 = sshll.u32 [#allocation18], 4
          %s723 = int_to_ptr.vmem [resolvable:$true] %s722
          %725 = dma.hbm_to_vmem [thread:$0]  %s8, 16, %s723, [#allocation17]
        $region48: #{tpu_custom_call.1} parent=11 // pred_fallthru
          _
        // Predicated region
        $region49: #{tpu_custom_call.1} parent=11 // pred_check
          %p726 = pneg %p493
        $region50: #{tpu_custom_call.1} parent=11 // pred_check_branch
          %728 = sbr.rel (%p726) target = $region52
        $region51: #{tpu_custom_call.1} parent=11 // pred_region
          _
        $region52: #{tpu_custom_call.1} parent=11 // pred_fallthru
          _
        // Predicated region
        $region53: #{tpu_custom_call.1} parent=11 // pred_check
          %p729 = pneg %p514
        $region54: #{tpu_custom_call.1} parent=11 // pred_check_branch
          %731 = sbr.rel (%p729) target = $region56
        $region55: #{tpu_custom_call.1} parent=11 // pred_region
          _
        $region56: #{tpu_custom_call.1} parent=11 // pred_fallthru
          _
        // Predicated region
        $region57: #{tpu_custom_call.1} parent=11 // pred_check
          %p732 = pneg %p535
        $region58: #{tpu_custom_call.1} parent=11 // pred_check_branch
          %734 = sbr.rel (%p732) target = $region60
        $region59: #{tpu_custom_call.1} parent=11 // pred_region
          %s736 = ssub.s32 1024, 1024
          %737 = vsyncadd [#allocation29], %s736
          %s738 = sshll.u32 [#allocation30], 4
          %s739 = int_to_ptr.vmem [resolvable:$true] %s738
          %744 = dma.hbm_to_vmem [thread:$0]  %s20, 1024, %s739, [#allocation29], 64, 64, 4
        $region60: #{tpu_custom_call.1} parent=11 // pred_fallthru
          _
        // Predicated region
        $region61: #{tpu_custom_call.1} parent=11 // pred_check
          %p745 = pneg %p556
        $region62: #{tpu_custom_call.1} parent=11 // pred_check_branch
          %747 = sbr.rel (%p745) target = $region64
        $region63: #{tpu_custom_call.1} parent=11 // pred_region
          _
        $region64: #{tpu_custom_call.1} parent=11 // pred_fallthru
          _
      $region12: #{tpu_custom_call.1} parent=5 // pred_fallthru
        _
      %p748 = scmp.lt.s32.totalorder %s49, 2
      // Predicated region
      $region65: #{tpu_custom_call.1} parent=5 // pred_check
        %p749 = pneg %p748
      $region66: #{tpu_custom_call.1} parent=5 // pred_check_branch
        %751 = sbr.rel (%p749) target = $region68
      $region67: #{tpu_custom_call.1} parent=5 // pred_region
        // Predicated region
        $region69: #{tpu_custom_call.1} parent=67 // pred_check
          %p752 = pneg %p258
        $region70: #{tpu_custom_call.1} parent=67 // pred_check_branch
          %754 = sbr.rel (%p752) target = $region72
        $region71: #{tpu_custom_call.1} parent=67 // pred_region
          %s755 = sand.u32 %s49, 1
          %s756 = scalar_lea.sflag [#allocation20], %s755
          %s757 = sand.u32 %s248, 1
          %s758 = smul.addr %s757, 128
          %s759 = scalar_lea.vmem [#allocation19], %s758
          %s761 = ssub.s32 2048, 2048
          %762 = vsyncadd %s756, %s761
          %s763 = smul.addr %s49, 32
          %s764 = smul.addr %s763, 64
          %s765 = scalar_lea.hbm %s9, %s764
          %s766 = sshll.u32 %s759, 4
          %s767 = int_to_ptr.vmem [resolvable:$true] %s766
          %772 = dma.hbm_to_vmem [thread:$0]  %s765, 2048, %s767, %s756, 64, 64, 4
        $region72: #{tpu_custom_call.1} parent=67 // pred_fallthru
          _
        // Predicated region
        $region73: #{tpu_custom_call.1} parent=67 // pred_check
          %p773 = pneg %p284
        $region74: #{tpu_custom_call.1} parent=67 // pred_check_branch
          %775 = sbr.rel (%p773) target = $region76
        $region75: #{tpu_custom_call.1} parent=67 // pred_region
          %p776 = scmp.lt.s32.totalorder %s49, 1
          %s777 = scalar_select %p776, %s49, 1
          %s778 = scalar_lea.vmem %s10, %s777
        $region76: #{tpu_custom_call.1} parent=67 // pred_fallthru
          _
        // Predicated region
        $region77: #{tpu_custom_call.1} parent=67 // pred_check
          %p779 = pneg %p310
        $region78: #{tpu_custom_call.1} parent=67 // pred_check_branch
          %781 = sbr.rel (%p779) target = $region80
        $region79: #{tpu_custom_call.1} parent=67 // pred_region
          %s782 = sand.u32 %s49, 1
          %s783 = scalar_lea.sflag [#allocation20], %s782
          %s784 = sand.u32 %s300, 1
          %s785 = smul.addr %s784, 128
          %s786 = scalar_lea.vmem [#allocation21], %s785
          %s788 = ssub.s32 2048, 2048
          %789 = vsyncadd %s783, %s788
          %s790 = smul.addr %s49, 32
          %s791 = smul.addr %s790, 64
          %s792 = scalar_lea.hbm %s11, %s791
          %s793 = sshll.u32 %s786, 4
          %s794 = int_to_ptr.vmem [resolvable:$true] %s793
          %799 = dma.hbm_to_vmem [thread:$0]  %s792, 2048, %s794, %s783, 64, 64, 4
        $region80: #{tpu_custom_call.1} parent=67 // pred_fallthru
          _
        // Predicated region
        $region81: #{tpu_custom_call.1} parent=67 // pred_check
          %p800 = pneg %p336
        $region82: #{tpu_custom_call.1} parent=67 // pred_check_branch
          %802 = sbr.rel (%p800) target = $region84
        $region83: #{tpu_custom_call.1} parent=67 // pred_region
          %p803 = scmp.lt.s32.totalorder %s49, 1
          %s804 = scalar_select %p803, %s49, 1
          %s805 = scalar_lea.vmem %s12, %s804
        $region84: #{tpu_custom_call.1} parent=67 // pred_fallthru
          _
        // Predicated region
        $region85: #{tpu_custom_call.1} parent=67 // pred_check
          %p806 = pneg %p362
        $region86: #{tpu_custom_call.1} parent=67 // pred_check_branch
          %808 = sbr.rel (%p806) target = $region88
        $region87: #{tpu_custom_call.1} parent=67 // pred_region
          %s809 = sand.u32 %s49, 1
          %s810 = scalar_lea.sflag [#allocation23], %s809
          %s811 = sand.u32 %s352, 1
          %s812 = smul.addr %s811, 64
          %s813 = scalar_lea.vmem [#allocation22], %s812
          %s815 = ssub.s32 1024, 1024
          %816 = vsyncadd %s810, %s815
          %s817 = smul.addr %s49, 16
          %s818 = smul.addr %s817, 64
          %s819 = scalar_lea.hbm %s13, %s818
          %s820 = sshll.u32 %s813, 4
          %s821 = int_to_ptr.vmem [resolvable:$true] %s820
          %826 = dma.hbm_to_vmem [thread:$0]  %s819, 1024, %s821, %s810, 64, 64, 4
        $region88: #{tpu_custom_call.1} parent=67 // pred_fallthru
          _
        // Predicated region
        $region89: #{tpu_custom_call.1} parent=67 // pred_check
          %p827 = pneg %p388
        $region90: #{tpu_custom_call.1} parent=67 // pred_check_branch
          %829 = sbr.rel (%p827) target = $region92
        $region91: #{tpu_custom_call.1} parent=67 // pred_region
          %s830 = sand.u32 %s49, 1
          %s831 = scalar_lea.sflag [#allocation23], %s830
          %s832 = sand.u32 %s378, 1
          %s833 = scalar_lea.vmem [#allocation24], %s832
          %s835 = ssub.s32 16, 16
          %836 = vsyncadd %s831, %s835
          %s837 = smul.addr %s49, 16
          %s838 = scalar_lea.hbm %s14, %s837
          %s840 = sshll.u32 %s833, 4
          %s841 = int_to_ptr.vmem [resolvable:$true] %s840
          %843 = dma.hbm_to_vmem [thread:$0]  %s838, 16, %s841, %s831
        $region92: #{tpu_custom_call.1} parent=67 // pred_fallthru
          _
        // Predicated region
        $region93: #{tpu_custom_call.1} parent=67 // pred_check
          %p844 = pneg %p414
        $region94: #{tpu_custom_call.1} parent=67 // pred_check_branch
          %846 = sbr.rel (%p844) target = $region96
        $region95: #{tpu_custom_call.1} parent=67 // pred_region
          %s847 = sand.u32 %s49, 1
          %s848 = scalar_lea.sflag [#allocation26], %s847
          %s849 = sand.u32 %s404, 1
          %s850 = scalar_lea.vmem [#allocation25], %s849
          %s852 = ssub.s32 16, 16
          %853 = vsyncadd %s848, %s852
          %s854 = smul.addr %s49, 16
          %s855 = scalar_lea.hbm %s15, %s854
          %s857 = sshll.u32 %s850, 4
          %s858 = int_to_ptr.vmem [resolvable:$true] %s857
          %860 = dma.hbm_to_vmem [thread:$0]  %s855, 16, %s858, %s848
        $region96: #{tpu_custom_call.1} parent=67 // pred_fallthru
          _
        // Predicated region
        $region97: #{tpu_custom_call.1} parent=67 // pred_check
          %p861 = pneg %p440
        $region98: #{tpu_custom_call.1} parent=67 // pred_check_branch
          %863 = sbr.rel (%p861) target = $region100
        $region99: #{tpu_custom_call.1} parent=67 // pred_region
          %s864 = sand.u32 %s49, 1
          %s865 = scalar_lea.sflag [#allocation26], %s864
          %s866 = sand.u32 %s430, 1
          %s867 = scalar_lea.vmem [#allocation27], %s866
          %s869 = ssub.s32 16, 16
          %870 = vsyncadd %s865, %s869
          %s871 = smul.addr %s49, 16
          %s872 = scalar_lea.hbm %s16, %s871
          %s874 = sshll.u32 %s867, 4
          %s875 = int_to_ptr.vmem [resolvable:$true] %s874
          %877 = dma.hbm_to_vmem [thread:$0]  %s872, 16, %s875, %s865
        $region100: #{tpu_custom_call.1} parent=67 // pred_fallthru
          _
        // Predicated region
        $region101: #{tpu_custom_call.1} parent=67 // pred_check
          %p878 = pneg %p466
        $region102: #{tpu_custom_call.1} parent=67 // pred_check_branch
          %880 = sbr.rel (%p878) target = $region104
        $region103: #{tpu_custom_call.1} parent=67 // pred_region
          %s881 = sand.u32 %s49, 1
          %s882 = scalar_lea.sflag [#allocation29], %s881
          %s883 = sand.u32 %s456, 1
          %s884 = scalar_lea.vmem [#allocation28], %s883
          %s886 = ssub.s32 16, 16
          %887 = vsyncadd %s882, %s886
          %s888 = smul.addr %s49, 16
          %s889 = scalar_lea.hbm %s17, %s888
          %s891 = sshll.u32 %s884, 4
          %s892 = int_to_ptr.vmem [resolvable:$true] %s891
          %894 = dma.hbm_to_vmem [thread:$0]  %s889, 16, %s892, %s882
        $region104: #{tpu_custom_call.1} parent=67 // pred_fallthru
          _
      $region68: #{tpu_custom_call.1} parent=5 // pred_fallthru
        _
      %p895 = scmp.le.s32.totalorder 1, %s49
      %p896 = scmp.lt.s32.totalorder %s49, 3
      %p897 = pnand %p895, %p896
      %p898 = pneg %p897
      // Predicated region
      $region105: #{tpu_custom_call.1} parent=5 // pred_check
        _
      $region106: #{tpu_custom_call.1} parent=5 // pred_check_branch
        %900 = sbr.rel (%p897) target = $region108
      $region107: #{tpu_custom_call.1} parent=5 // pred_region
        %s901 = ssub.s32 %s49, 1
        // Predicated region
        $region109: #{tpu_custom_call.1} parent=107 // pred_check
          %p902 = pneg %p70
        $region110: #{tpu_custom_call.1} parent=107 // pred_check_branch
          %904 = sbr.rel (%p902) target = $region112
        $region111: #{tpu_custom_call.1} parent=107 // pred_region
          %905 = dma.done [#allocation5], 256
        $region112: #{tpu_custom_call.1} parent=107 // pred_fallthru
          _
        // Predicated region
        $region113: #{tpu_custom_call.1} parent=107 // pred_check
          %p906 = pneg %p91
        $region114: #{tpu_custom_call.1} parent=107 // pred_check_branch
          %908 = sbr.rel (%p906) target = $region116
        $region115: #{tpu_custom_call.1} parent=107 // pred_region
          %909 = dma.done [#allocation8], 256
        $region116: #{tpu_custom_call.1} parent=107 // pred_fallthru
          _
        // Predicated region
        $region117: #{tpu_custom_call.1} parent=107 // pred_check
          %p910 = pneg %p112
        $region118: #{tpu_custom_call.1} parent=107 // pred_check_branch
          %912 = sbr.rel (%p910) target = $region120
        $region119: #{tpu_custom_call.1} parent=107 // pred_region
          %913 = dma.done [#allocation8], 128
        $region120: #{tpu_custom_call.1} parent=107 // pred_fallthru
          _
        // Predicated region
        $region121: #{tpu_custom_call.1} parent=107 // pred_check
          %p914 = pneg %p133
        $region122: #{tpu_custom_call.1} parent=107 // pred_check_branch
          %916 = sbr.rel (%p914) target = $region124
        $region123: #{tpu_custom_call.1} parent=107 // pred_region
          %917 = dma.done [#allocation11], 128
        $region124: #{tpu_custom_call.1} parent=107 // pred_fallthru
          _
        // Predicated region
        $region125: #{tpu_custom_call.1} parent=107 // pred_check
          %p918 = pneg %p154
        $region126: #{tpu_custom_call.1} parent=107 // pred_check_branch
          %920 = sbr.rel (%p918) target = $region128
        $region127: #{tpu_custom_call.1} parent=107 // pred_region
          %921 = dma.done [#allocation11], 256
        $region128: #{tpu_custom_call.1} parent=107 // pred_fallthru
          _
        // Predicated region
        $region129: #{tpu_custom_call.1} parent=107 // pred_check
          %p922 = pneg %p175
        $region130: #{tpu_custom_call.1} parent=107 // pred_check_branch
          %924 = sbr.rel (%p922) target = $region132
        $region131: #{tpu_custom_call.1} parent=107 // pred_region
          %925 = dma.done [#allocation14], 1024
        $region132: #{tpu_custom_call.1} parent=107 // pred_fallthru
          _
        // Predicated region
        $region133: #{tpu_custom_call.1} parent=107 // pred_check
          %p926 = pneg %p196
        $region134: #{tpu_custom_call.1} parent=107 // pred_check_branch
          %928 = sbr.rel (%p926) target = $region136
        $region135: #{tpu_custom_call.1} parent=107 // pred_region
          %929 = dma.done [#allocation14], 16
        $region136: #{tpu_custom_call.1} parent=107 // pred_fallthru
          _
        // Predicated region
        $region137: #{tpu_custom_call.1} parent=107 // pred_check
          %p930 = pneg %p217
        $region138: #{tpu_custom_call.1} parent=107 // pred_check_branch
          %932 = sbr.rel (%p930) target = $region140
        $region139: #{tpu_custom_call.1} parent=107 // pred_region
          %933 = dma.done [#allocation17], 1024
        $region140: #{tpu_custom_call.1} parent=107 // pred_fallthru
          _
        // Predicated region
        $region141: #{tpu_custom_call.1} parent=107 // pred_check
          %p934 = pneg %p238
        $region142: #{tpu_custom_call.1} parent=107 // pred_check_branch
          %936 = sbr.rel (%p934) target = $region144
        $region143: #{tpu_custom_call.1} parent=107 // pred_region
          %937 = dma.done [#allocation17], 16
        $region144: #{tpu_custom_call.1} parent=107 // pred_fallthru
          _
        %s938 = sand.u32 %s54, 1
        %s939 = scalar_lea.sflag [#allocation20], %s938
        %s940 = sand.u32 %s251, 1
        %s941 = smul.addr %s940, 128
        %s942 = scalar_lea.vmem [#allocation19], %s941
        // Predicated region
        $region145: #{tpu_custom_call.1} parent=107 // pred_check
          %p943 = pneg %p264
        $region146: #{tpu_custom_call.1} parent=107 // pred_check_branch
          %945 = sbr.rel (%p943) target = $region148
        $region147: #{tpu_custom_call.1} parent=107 // pred_region
          %946 = dma.done %s939, 2048
        $region148: #{tpu_custom_call.1} parent=107 // pred_fallthru
          _
        %s947 = sand.u32 %s54, 1
        %s948 = scalar_lea.sflag [#allocation20], %s947
        %s949 = sand.u32 %s303, 1
        %s950 = smul.addr %s949, 128
        %s951 = scalar_lea.vmem [#allocation21], %s950
        // Predicated region
        $region149: #{tpu_custom_call.1} parent=107 // pred_check
          %p952 = pneg %p316
        $region150: #{tpu_custom_call.1} parent=107 // pred_check_branch
          %954 = sbr.rel (%p952) target = $region152
        $region151: #{tpu_custom_call.1} parent=107 // pred_region
          %955 = dma.done %s948, 2048
        $region152: #{tpu_custom_call.1} parent=107 // pred_fallthru
          _
        %s956 = sand.u32 %s54, 1
        %s957 = scalar_lea.sflag [#allocation23], %s956
        %s958 = sand.u32 %s355, 1
        %s959 = smul.addr %s958, 64
        %s960 = scalar_lea.vmem [#allocation22], %s959
        // Predicated region
        $region153: #{tpu_custom_call.1} parent=107 // pred_check
          %p961 = pneg %p368
        $region154: #{tpu_custom_call.1} parent=107 // pred_check_branch
          %963 = sbr.rel (%p961) target = $region156
        $region155: #{tpu_custom_call.1} parent=107 // pred_region
          %964 = dma.done %s957, 1024
        $region156: #{tpu_custom_call.1} parent=107 // pred_fallthru
          _
        %s965 = sand.u32 %s54, 1
        %s966 = scalar_lea.sflag [#allocation23], %s965
        %s967 = sand.u32 %s381, 1
        %s968 = scalar_lea.vmem [#allocation24], %s967
        // Predicated region
        $region157: #{tpu_custom_call.1} parent=107 // pred_check
          %p969 = pneg %p394
        $region158: #{tpu_custom_call.1} parent=107 // pred_check_branch
          %971 = sbr.rel (%p969) target = $region160
        $region159: #{tpu_custom_call.1} parent=107 // pred_region
          %972 = dma.done %s966, 16
        $region160: #{tpu_custom_call.1} parent=107 // pred_fallthru
          _
        %s973 = sand.u32 %s54, 1
        %s974 = scalar_lea.sflag [#allocation26], %s973
        %s975 = sand.u32 %s407, 1
        %s976 = scalar_lea.vmem [#allocation25], %s975
        // Predicated region
        $region161: #{tpu_custom_call.1} parent=107 // pred_check
          %p977 = pneg %p420
        $region162: #{tpu_custom_call.1} parent=107 // pred_check_branch
          %979 = sbr.rel (%p977) target = $region164
        $region163: #{tpu_custom_call.1} parent=107 // pred_region
          %980 = dma.done %s974, 16
        $region164: #{tpu_custom_call.1} parent=107 // pred_fallthru
          _
        %s981 = sand.u32 %s54, 1
        %s982 = scalar_lea.sflag [#allocation26], %s981
        %s983 = sand.u32 %s433, 1
        %s984 = scalar_lea.vmem [#allocation27], %s983
        // Predicated region
        $region165: #{tpu_custom_call.1} parent=107 // pred_check
          %p985 = pneg %p446
        $region166: #{tpu_custom_call.1} parent=107 // pred_check_branch
          %987 = sbr.rel (%p985) target = $region168
        $region167: #{tpu_custom_call.1} parent=107 // pred_region
          %988 = dma.done %s982, 16
        $region168: #{tpu_custom_call.1} parent=107 // pred_fallthru
          _
        %s989 = sand.u32 %s54, 1
        %s990 = scalar_lea.sflag [#allocation29], %s989
        %s991 = sand.u32 %s459, 1
        %s992 = scalar_lea.vmem [#allocation28], %s991
        // Predicated region
        $region169: #{tpu_custom_call.1} parent=107 // pred_check
          %p993 = pneg %p472
        $region170: #{tpu_custom_call.1} parent=107 // pred_check_branch
          %995 = sbr.rel (%p993) target = $region172
        $region171: #{tpu_custom_call.1} parent=107 // pred_region
          %996 = dma.done %s990, 16
        $region172: #{tpu_custom_call.1} parent=107 // pred_fallthru
          _
        // Predicated region
        $region173: #{tpu_custom_call.1} parent=107 // pred_check
          %p997 = pneg %p535
        $region174: #{tpu_custom_call.1} parent=107 // pred_check_branch
          %999 = sbr.rel (%p997) target = $region176
        $region175: #{tpu_custom_call.1} parent=107 // pred_region
          %1000 = dma.done [#allocation29], 1024
        $region176: #{tpu_custom_call.1} parent=107 // pred_fallthru
          _
        %p1001 = pneg %p70
        %p1002 = pneg %p67
        %p1003 = pneg %p91
        %p1004 = pneg %p88
        %p1005 = pneg %p112
        %p1006 = pneg %p109
        %p1007 = pneg %p133
        %p1008 = pneg %p130
        %p1009 = pneg %p154
        %p1010 = pneg %p151
        %p1011 = pneg %p175
        %p1012 = pneg %p172
        %p1013 = pneg %p196
        %p1014 = pneg %p193
        %p1015 = pneg %p217
        %p1016 = pneg %p214
        %p1017 = pneg %p238
        %p1018 = pneg %p235
        %s1019 = sand.u32 %s54, 1
        %s1020 = scalar_lea.sflag [#allocation20], %s1019
        %s1021 = sand.u32 %s251, 1
        %s1022 = smul.addr %s1021, 128
        %s1023 = scalar_lea.vmem [#allocation19], %s1022
        %p1024 = pneg %p264
        %p1025 = pneg %p261
        %p1026 = scmp.lt.s32.totalorder %s54, 1
        %s1027 = scalar_select %p1026, %s54, 1
        %s1028 = scalar_lea.vmem %s10, %s1027
        %p1029 = pneg %p290
        %p1030 = pneg %p287
        %s1031 = sand.u32 %s54, 1
        %s1032 = scalar_lea.sflag [#allocation20], %s1031
        %s1033 = sand.u32 %s303, 1
        %s1034 = smul.addr %s1033, 128
        %s1035 = scalar_lea.vmem [#allocation21], %s1034
        %p1036 = pneg %p316
        %p1037 = pneg %p313
        %p1038 = scmp.lt.s32.totalorder %s54, 1
        %s1039 = scalar_select %p1038, %s54, 1
        %s1040 = scalar_lea.vmem %s12, %s1039
        %p1041 = pneg %p342
        %p1042 = pneg %p339
        %s1043 = sand.u32 %s54, 1
        %s1044 = scalar_lea.sflag [#allocation23], %s1043
        %s1045 = sand.u32 %s355, 1
        %s1046 = smul.addr %s1045, 64
        %s1047 = scalar_lea.vmem [#allocation22], %s1046
        %p1048 = pneg %p368
        %p1049 = pneg %p365
        %s1050 = sand.u32 %s54, 1
        %s1051 = scalar_lea.sflag [#allocation23], %s1050
        %s1052 = sand.u32 %s381, 1
        %s1053 = scalar_lea.vmem [#allocation24], %s1052
        %p1054 = pneg %p394
        %p1055 = pneg %p391
        %s1056 = sand.u32 %s54, 1
        %s1057 = scalar_lea.sflag [#allocation26], %s1056
        %s1058 = sand.u32 %s407, 1
        %s1059 = scalar_lea.vmem [#allocation25], %s1058
        %p1060 = pneg %p420
        %p1061 = pneg %p417
        %s1062 = sand.u32 %s54, 1
        %s1063 = scalar_lea.sflag [#allocation26], %s1062
        %s1064 = sand.u32 %s433, 1
        %s1065 = scalar_lea.vmem [#allocation27], %s1064
        %p1066 = pneg %p446
        %p1067 = pneg %p443
        %s1068 = sand.u32 %s54, 1
        %s1069 = scalar_lea.sflag [#allocation29], %s1068
        %s1070 = sand.u32 %s459, 1
        %s1071 = scalar_lea.vmem [#allocation28], %s1070
        %p1072 = pneg %p472
        %p1073 = pneg %p469
        %p1074 = pneg %p493
        %p1075 = pneg %p490
        %p1076 = pneg %p514
        %p1077 = pneg %p511
        %p1078 = pneg %p535
        %p1079 = pneg %p532
        %p1080 = pneg %p556
        %p1081 = pneg %p553
        %p1082 = pneg %p577
        %p1083 = pneg %p574
        %p1084 = pneg %p598
        %p1085 = pneg %p595
        %p1086 = scmp.lt.s32.totalorder %s54, 1
        %s1087 = scalar_select %p1086, %s54, 1
        %s1088 = scalar_lea.vmem %s10, %s1087
        %p1089 = scmp.lt.s32.totalorder %s54, 1
        %s1090 = scalar_select %p1089, %s54, 1
        %s1091 = scalar_lea.vmem %s12, %s1090
        %p1093 = scmp.eq.s32.totalorder %s54, 0
        // Predicated region
        $region177: #{tpu_custom_call.1} parent=107 // pred_check
          %p1094 = pneg %p1093
        $region178: #{tpu_custom_call.1} parent=107 // pred_check_branch
          %1096 = sbr.rel (%p1094) target = $region180
        $region179: #{tpu_custom_call.1} parent=107 // pred_region
          %v1097 = vld [vmem:[#allocation4] sm:$0xff]
          %v1098 = vld [vmem:[#allocation4 + $0x8] sm:$0xff]
          %v1099 = vpack.c.bf16 %v1098, %v1097
          %v1100 = vld [vmem:[#allocation13] sm:$0xf]
          %v1101 = vld [vmem:[#allocation13 + $0x4] sm:$0xf]
          %v1102 = vld [vmem:[#allocation13 + $0x8] sm:$0xf]
          %v1103 = vld [vmem:[#allocation13 + $0xc] sm:$0xf]
          %v1104 = vld [vmem:[#allocation13 + $0x10] sm:$0xf]
          %v1105 = vld [vmem:[#allocation13 + $0x14] sm:$0xf]
          %v1106 = vld [vmem:[#allocation13 + $0x18] sm:$0xf]
          %v1107 = vld [vmem:[#allocation13 + $0x1c] sm:$0xf]
          %v1108 = vld [vmem:[#allocation13 + $0x20] sm:$0xf]
          %v1109 = vld [vmem:[#allocation13 + $0x24] sm:$0xf]
          %v1110 = vld [vmem:[#allocation13 + $0x28] sm:$0xf]
          %v1111 = vld [vmem:[#allocation13 + $0x2c] sm:$0xf]
          %v1112 = vld [vmem:[#allocation13 + $0x30] sm:$0xf]
          %v1113 = vld [vmem:[#allocation13 + $0x34] sm:$0xf]
          %v1114 = vld [vmem:[#allocation13 + $0x38] sm:$0xf]
          %v1115 = vld [vmem:[#allocation13 + $0x3c] sm:$0xf]
          %v1116 = vld [vmem:[#allocation15] sm:$0x1]
          %v1118 = vlaneseq
          %v1119 = vshrl.u32 %v1118, 7
          %v1120 = vsub.s32 0, %v1119
          %v1121 = vrot.slane %v1116, %v1120
          %v1139 = vunpack.c.l.b16 %v1100
          %v1140 = vunpack.c.l.b16 %v1101
          %v1141 = vunpack.c.l.b16 %v1102
          %v1142 = vunpack.c.l.b16 %v1103
          %v1143 = vunpack.c.l.b16 %v1104
          %v1144 = vunpack.c.l.b16 %v1105
          %v1145 = vunpack.c.l.b16 %v1106
          %v1146 = vunpack.c.l.b16 %v1107
          %v1147 = vunpack.c.l.b16 %v1108
          %v1148 = vunpack.c.l.b16 %v1109
          %v1149 = vunpack.c.l.b16 %v1110
          %v1150 = vunpack.c.l.b16 %v1111
          %v1151 = vunpack.c.l.b16 %v1112
          %v1152 = vunpack.c.l.b16 %v1113
          %v1153 = vunpack.c.l.b16 %v1114
          %v1154 = vunpack.c.l.b16 %v1115
          %v1155 = vpack.c.b16 %v1140, %v1139
          %v1156 = vpack.c.b16 %v1142, %v1141
          %v1157 = vpack.c.b16 %v1144, %v1143
          %v1158 = vpack.c.b16 %v1146, %v1145
          %v1159 = vpack.c.b16 %v1148, %v1147
          %v1160 = vpack.c.b16 %v1150, %v1149
          %v1161 = vpack.c.b16 %v1152, %v1151
          %v1162 = vpack.c.b16 %v1154, %v1153
          %1171 = vmatprep.subr.bf16.mxu0 0
          %1172 = vmatpush1.bf16.msra.mxu0 %v1155
          %1173 = vmatprep.subr.bf16.mxu0 0
          %1174 = vmatpush1.bf16.msra.mxu0 %v1156
          %1175 = vmatprep.subr.bf16.mxu0 0
          %1176 = vmatpush1.bf16.msra.mxu0 %v1157
          %1177 = vmatprep.subr.bf16.mxu0 0
          %1178 = vmatpush1.bf16.msra.mxu0 %v1158
          %1179 = vmatprep.subr.bf16.mxu0 0
          %1180 = vmatpush1.bf16.msra.mxu0 %v1159
          %1181 = vmatprep.subr.bf16.mxu0 0
          %1182 = vmatpush1.bf16.msra.mxu0 %v1160
          %1183 = vmatprep.subr.bf16.mxu0 0
          %1184 = vmatpush1.bf16.msra.mxu0 %v1161
          %1185 = vmatprep.subr.bf16.mxu0 0
          %1186 = vmatpush1.bf16.msra.mxu0 %v1162
          %1187 = vmatprep.subr.bf16.mxu0 0
          %1188 = vmatpush1.bf16.msra.mxu0 0
          %1189 = vmatprep.subr.bf16.mxu0 0
          %1190 = vmatpush1.bf16.msra.mxu0 0
          %1191 = vmatprep.subr.bf16.mxu0 0
          %1192 = vmatpush1.bf16.msra.mxu0 0
          %1193 = vmatprep.subr.bf16.mxu0 0
          %1194 = vmatpush1.bf16.msra.mxu0 0
          %1195 = vmatprep.subr.bf16.mxu0 0
          %1196 = vmatpush1.bf16.msra.mxu0 0
          %1197 = vmatprep.subr.bf16.mxu0 0
          %1198 = vmatpush1.bf16.msra.mxu0 0
          %1199 = vmatprep.subr.bf16.mxu0 0
          %1200 = vmatpush1.bf16.msra.mxu0 0
          %1201 = vmatprep.subr.bf16.mxu0 0
          %1202 = vmatpush1.bf16.msra.mxu0 0
          %1203 = vmatprep.mubr.bf16.mxu0 0
          %1204 = vmatmul.mubr.bf16.gmra.mrb[0].mxu0 %v1099
          %v1205 = vpop.f32.mrb[0].mxu0
          %v1206 = vadd.f32 %v1121, %v1205
          %v1207 = vpop.f32.mrb[0].mxu0
          %v1208 = vpop.f32.mrb[0].mxu0
          %v1209 = vadd.f32 %v1121, %v1208
          %v1210 = vpop.f32.mrb[0].mxu0
          %1211 = vdwg.mxu0
          %1212 = vst [vmem:[#allocation2] sm:$0xff] %v1206
          %1213 = vst [vmem:[#allocation2 + $0x8] sm:$0xff] %v1209
          %v1214 = vld [vmem:[#allocation7] sm:$0xff]
          %v1215 = vld [vmem:[#allocation7 + $0x8] sm:$0xff]
          %v1216 = vpack.c.bf16 %v1215, %v1214
          %v1217 = vld [vmem:[#allocation16] sm:$0xf]
          %v1218 = vld [vmem:[#allocation16 + $0x4] sm:$0xf]
          %v1219 = vld [vmem:[#allocation16 + $0x8] sm:$0xf]
          %v1220 = vld [vmem:[#allocation16 + $0xc] sm:$0xf]
          %v1221 = vld [vmem:[#allocation16 + $0x10] sm:$0xf]
          %v1222 = vld [vmem:[#allocation16 + $0x14] sm:$0xf]
          %v1223 = vld [vmem:[#allocation16 + $0x18] sm:$0xf]
          %v1224 = vld [vmem:[#allocation16 + $0x1c] sm:$0xf]
          %v1225 = vld [vmem:[#allocation16 + $0x20] sm:$0xf]
          %v1226 = vld [vmem:[#allocation16 + $0x24] sm:$0xf]
          %v1227 = vld [vmem:[#allocation16 + $0x28] sm:$0xf]
          %v1228 = vld [vmem:[#allocation16 + $0x2c] sm:$0xf]
          %v1229 = vld [vmem:[#allocation16 + $0x30] sm:$0xf]
          %v1230 = vld [vmem:[#allocation16 + $0x34] sm:$0xf]
          %v1231 = vld [vmem:[#allocation16 + $0x38] sm:$0xf]
          %v1232 = vld [vmem:[#allocation16 + $0x3c] sm:$0xf]
          %v1233 = vld [vmem:[#allocation18] sm:$0x1]
          %v1235 = vlaneseq
          %v1236 = vshrl.u32 %v1235, 7
          %v1237 = vsub.s32 0, %v1236
          %v1238 = vrot.slane %v1233, %v1237
          %v1256 = vunpack.c.l.b16 %v1217
          %v1257 = vunpack.c.l.b16 %v1218
          %v1258 = vunpack.c.l.b16 %v1219
          %v1259 = vunpack.c.l.b16 %v1220
          %v1260 = vunpack.c.l.b16 %v1221
          %v1261 = vunpack.c.l.b16 %v1222
          %v1262 = vunpack.c.l.b16 %v1223
          %v1263 = vunpack.c.l.b16 %v1224
          %v1264 = vunpack.c.l.b16 %v1225
          %v1265 = vunpack.c.l.b16 %v1226
          %v1266 = vunpack.c.l.b16 %v1227
          %v1267 = vunpack.c.l.b16 %v1228
          %v1268 = vunpack.c.l.b16 %v1229
          %v1269 = vunpack.c.l.b16 %v1230
          %v1270 = vunpack.c.l.b16 %v1231
          %v1271 = vunpack.c.l.b16 %v1232
          %v1272 = vpack.c.b16 %v1257, %v1256
          %v1273 = vpack.c.b16 %v1259, %v1258
          %v1274 = vpack.c.b16 %v1261, %v1260
          %v1275 = vpack.c.b16 %v1263, %v1262
          %v1276 = vpack.c.b16 %v1265, %v1264
          %v1277 = vpack.c.b16 %v1267, %v1266
          %v1278 = vpack.c.b16 %v1269, %v1268
          %v1279 = vpack.c.b16 %v1271, %v1270
          %1288 = vmatprep.subr.bf16.mxu0 0
          %1289 = vmatpush1.bf16.msra.mxu0 %v1272
          %1290 = vmatprep.subr.bf16.mxu0 0
          %1291 = vmatpush1.bf16.msra.mxu0 %v1273
          %1292 = vmatprep.subr.bf16.mxu0 0
          %1293 = vmatpush1.bf16.msra.mxu0 %v1274
          %1294 = vmatprep.subr.bf16.mxu0 0
          %1295 = vmatpush1.bf16.msra.mxu0 %v1275
          %1296 = vmatprep.subr.bf16.mxu0 0
          %1297 = vmatpush1.bf16.msra.mxu0 %v1276
          %1298 = vmatprep.subr.bf16.mxu0 0
          %1299 = vmatpush1.bf16.msra.mxu0 %v1277
          %1300 = vmatprep.subr.bf16.mxu0 0
          %1301 = vmatpush1.bf16.msra.mxu0 %v1278
          %1302 = vmatprep.subr.bf16.mxu0 0
          %1303 = vmatpush1.bf16.msra.mxu0 %v1279
          %1304 = vmatprep.subr.bf16.mxu0 0
          %1305 = vmatpush1.bf16.msra.mxu0 0
          %1306 = vmatprep.subr.bf16.mxu0 0
          %1307 = vmatpush1.bf16.msra.mxu0 0
          %1308 = vmatprep.subr.bf16.mxu0 0
          %1309 = vmatpush1.bf16.msra.mxu0 0
          %1310 = vmatprep.subr.bf16.mxu0 0
          %1311 = vmatpush1.bf16.msra.mxu0 0
          %1312 = vmatprep.subr.bf16.mxu0 0
          %1313 = vmatpush1.bf16.msra.mxu0 0
          %1314 = vmatprep.subr.bf16.mxu0 0
          %1315 = vmatpush1.bf16.msra.mxu0 0
          %1316 = vmatprep.subr.bf16.mxu0 0
          %1317 = vmatpush1.bf16.msra.mxu0 0
          %1318 = vmatprep.subr.bf16.mxu0 0
          %1319 = vmatpush1.bf16.msra.mxu0 0
          %1320 = vmatprep.mubr.bf16.mxu0 0
          %1321 = vmatmul.mubr.bf16.gmra.mrb[0].mxu0 %v1216
          %v1322 = vpop.f32.mrb[0].mxu0
          %v1323 = vadd.f32 %v1238, %v1322
          %v1324 = vpop.f32.mrb[0].mxu0
          %v1325 = vpop.f32.mrb[0].mxu0
          %v1326 = vadd.f32 %v1238, %v1325
          %v1327 = vpop.f32.mrb[0].mxu0
          %1328 = vdwg.mxu0
          %1329 = vst [vmem:[#allocation3] sm:$0xff] %v1323
          %1330 = vst [vmem:[#allocation3 + $0x8] sm:$0xff] %v1326
        $region180: #{tpu_custom_call.1} parent=107 // pred_fallthru
          _
        %v1331 = vld [vmem:[#allocation2] sm:$0xff]
        %v1332 = vld [vmem:[#allocation2 + $0x8] sm:$0xff]
        %v1333 = vld [vmem:[#allocation3] sm:$0xff]
        %v1334 = vld [vmem:[#allocation3 + $0x8] sm:$0xff]
        %v1335 = vpack.c.bf16 %v1332, %v1331
        %v1336 = vpack.c.bf16 %v1334, %v1333
        %v1337 = vld [vmem:[#allocation9] sm:$0xf]
        %v1338 = vld [vmem:[#allocation9 + $0x4] sm:$0xf]
        %v1341 = vunpack.c.l.b16 %v1337
        %v1342 = vunpack.c.l.b16 %v1338
        %v1343 = vpack.c.b16 %v1342, %v1341
        %vm1344 = vcmask 130048
        %v1346 = vsel %vm1344, %v1343, 0
        %1348 = vmatprep.subr.bf16.mxu0 0
        %1349 = vmatpush1.bf16.msra.mxu0 %v1335
        %1350 = vmatprep.subr.bf16.mxu0 0
        %1351 = vmatpush1.bf16.msra.mxu0 0
        %1352 = vmatprep.subr.bf16.mxu0 0
        %1353 = vmatpush1.bf16.msra.mxu0 0
        %1354 = vmatprep.subr.bf16.mxu0 0
        %1355 = vmatpush1.bf16.msra.mxu0 0
        %1356 = vmatprep.subr.bf16.mxu0 0
        %1357 = vmatpush1.bf16.msra.mxu0 0
        %1358 = vmatprep.subr.bf16.mxu0 0
        %1359 = vmatpush1.bf16.msra.mxu0 0
        %1360 = vmatprep.subr.bf16.mxu0 0
        %1361 = vmatpush1.bf16.msra.mxu0 0
        %1362 = vmatprep.subr.bf16.mxu0 0
        %1363 = vmatpush1.bf16.msra.mxu0 0
        %1364 = vmatprep.subr.bf16.mxu0 0
        %1365 = vmatpush1.bf16.msra.mxu0 0
        %1366 = vmatprep.subr.bf16.mxu0 0
        %1367 = vmatpush1.bf16.msra.mxu0 0
        %1368 = vmatprep.subr.bf16.mxu0 0
        %1369 = vmatpush1.bf16.msra.mxu0 0
        %1370 = vmatprep.subr.bf16.mxu0 0
        %1371 = vmatpush1.bf16.msra.mxu0 0
        %1372 = vmatprep.subr.bf16.mxu0 0
        %1373 = vmatpush1.bf16.msra.mxu0 0
        %1374 = vmatprep.subr.bf16.mxu0 0
        %1375 = vmatpush1.bf16.msra.mxu0 0
        %1376 = vmatprep.subr.bf16.mxu0 0
        %1377 = vmatpush1.bf16.msra.mxu0 0
        %1378 = vmatprep.subr.bf16.mxu0 0
        %1379 = vmatpush1.bf16.msra.mxu0 0
        %1380 = vmatprep.mubr.bf16.mxu0 0
        %1381 = vmatmul.mubr.bf16.gmra.mrb[0].mxu0 %v1346
        %v1382 = vpop.f32.mrb[0].mxu0
        %v1383 = vadd.f32 0.0, %v1382
        %v1384 = vpop.f32.mrb[0].mxu0
        %v1385 = vpop.f32.mrb[0].mxu0
        %v1386 = vadd.f32 0.0, %v1385
        %v1387 = vpop.f32.mrb[0].mxu0
        %1388 = vdwg.mxu0
        %v1389 = vpack.c.bf16 %v1386, %v1383
        %v1390 = vld [vmem:[%s942] sm:$0xf]
        %v1391 = vld [vmem:[%s942 + $0x4] sm:$0xf]
        %v1392 = vld [vmem:[%s942 + $0x8] sm:$0xf]
        %v1393 = vld [vmem:[%s942 + $0xc] sm:$0xf]
        %v1394 = vld [vmem:[%s942 + $0x10] sm:$0xf]
        %v1395 = vld [vmem:[%s942 + $0x14] sm:$0xf]
        %v1396 = vld [vmem:[%s942 + $0x18] sm:$0xf]
        %v1397 = vld [vmem:[%s942 + $0x1c] sm:$0xf]
        %v1398 = vld [vmem:[%s942 + $0x20] sm:$0xf]
        %v1399 = vld [vmem:[%s942 + $0x24] sm:$0xf]
        %v1400 = vld [vmem:[%s942 + $0x28] sm:$0xf]
        %v1401 = vld [vmem:[%s942 + $0x2c] sm:$0xf]
        %v1402 = vld [vmem:[%s942 + $0x30] sm:$0xf]
        %v1403 = vld [vmem:[%s942 + $0x34] sm:$0xf]
        %v1404 = vld [vmem:[%s942 + $0x38] sm:$0xf]
        %v1405 = vld [vmem:[%s942 + $0x3c] sm:$0xf]
        %v1406 = vld [vmem:[%s942 + $0x40] sm:$0xf]
        %v1407 = vld [vmem:[%s942 + $0x44] sm:$0xf]
        %v1408 = vld [vmem:[%s942 + $0x48] sm:$0xf]
        %v1409 = vld [vmem:[%s942 + $0x4c] sm:$0xf]
        %v1410 = vld [vmem:[%s942 + $0x50] sm:$0xf]
        %v1411 = vld [vmem:[%s942 + $0x54] sm:$0xf]
        %v1412 = vld [vmem:[%s942 + $0x58] sm:$0xf]
        %v1413 = vld [vmem:[%s942 + $0x5c] sm:$0xf]
        %v1414 = vld [vmem:[%s942 + $0x60] sm:$0xf]
        %v1415 = vld [vmem:[%s942 + $0x64] sm:$0xf]
        %v1416 = vld [vmem:[%s942 + $0x68] sm:$0xf]
        %v1417 = vld [vmem:[%s942 + $0x6c] sm:$0xf]
        %v1418 = vld [vmem:[%s942 + $0x70] sm:$0xf]
        %v1419 = vld [vmem:[%s942 + $0x74] sm:$0xf]
        %v1420 = vld [vmem:[%s942 + $0x78] sm:$0xf]
        %v1421 = vld [vmem:[%s942 + $0x7c] sm:$0xf]
        %v1422 = vld [vmem:[%s1088] sm:$0x1]
        %v1424 = vlaneseq
        %v1425 = vshrl.u32 %v1424, 7
        %v1426 = vsub.s32 0, %v1425
        %v1427 = vrot.slane %v1422, %v1426
        %v1461 = vunpack.c.l.b16 %v1390
        %v1462 = vunpack.c.l.b16 %v1391
        %v1463 = vunpack.c.l.b16 %v1392
        %v1464 = vunpack.c.l.b16 %v1393
        %v1465 = vunpack.c.l.b16 %v1394
        %v1466 = vunpack.c.l.b16 %v1395
        %v1467 = vunpack.c.l.b16 %v1396
        %v1468 = vunpack.c.l.b16 %v1397
        %v1469 = vunpack.c.l.b16 %v1398
        %v1470 = vunpack.c.l.b16 %v1399
        %v1471 = vunpack.c.l.b16 %v1400
        %v1472 = vunpack.c.l.b16 %v1401
        %v1473 = vunpack.c.l.b16 %v1402
        %v1474 = vunpack.c.l.b16 %v1403
        %v1475 = vunpack.c.l.b16 %v1404
        %v1476 = vunpack.c.l.b16 %v1405
        %v1477 = vunpack.c.l.b16 %v1406
        %v1478 = vunpack.c.l.b16 %v1407
        %v1479 = vunpack.c.l.b16 %v1408
        %v1480 = vunpack.c.l.b16 %v1409
        %v1481 = vunpack.c.l.b16 %v1410
        %v1482 = vunpack.c.l.b16 %v1411
        %v1483 = vunpack.c.l.b16 %v1412
        %v1484 = vunpack.c.l.b16 %v1413
        %v1485 = vunpack.c.l.b16 %v1414
        %v1486 = vunpack.c.l.b16 %v1415
        %v1487 = vunpack.c.l.b16 %v1416
        %v1488 = vunpack.c.l.b16 %v1417
        %v1489 = vunpack.c.l.b16 %v1418
        %v1490 = vunpack.c.l.b16 %v1419
        %v1491 = vunpack.c.l.b16 %v1420
        %v1492 = vunpack.c.l.b16 %v1421
        %v1493 = vpack.c.b16 %v1462, %v1461
        %v1494 = vpack.c.b16 %v1464, %v1463
        %v1495 = vpack.c.b16 %v1466, %v1465
        %v1496 = vpack.c.b16 %v1468, %v1467
        %v1497 = vpack.c.b16 %v1470, %v1469
        %v1498 = vpack.c.b16 %v1472, %v1471
        %v1499 = vpack.c.b16 %v1474, %v1473
        %v1500 = vpack.c.b16 %v1476, %v1475
        %v1501 = vpack.c.b16 %v1478, %v1477
        %v1502 = vpack.c.b16 %v1480, %v1479
        %v1503 = vpack.c.b16 %v1482, %v1481
        %v1504 = vpack.c.b16 %v1484, %v1483
        %v1505 = vpack.c.b16 %v1486, %v1485
        %v1506 = vpack.c.b16 %v1488, %v1487
        %v1507 = vpack.c.b16 %v1490, %v1489
        %v1508 = vpack.c.b16 %v1492, %v1491
        %1525 = vmatprep.subr.bf16.mxu0 0
        %1526 = vmatpush1.bf16.msra.mxu0 %v1493
        %1527 = vmatprep.subr.bf16.mxu0 0
        %1528 = vmatpush1.bf16.msra.mxu0 %v1494
        %1529 = vmatprep.subr.bf16.mxu0 0
        %1530 = vmatpush1.bf16.msra.mxu0 %v1495
        %1531 = vmatprep.subr.bf16.mxu0 0
        %1532 = vmatpush1.bf16.msra.mxu0 %v1496
        %1533 = vmatprep.subr.bf16.mxu0 0
        %1534 = vmatpush1.bf16.msra.mxu0 %v1497
        %1535 = vmatprep.subr.bf16.mxu0 0
        %1536 = vmatpush1.bf16.msra.mxu0 %v1498
        %1537 = vmatprep.subr.bf16.mxu0 0
        %1538 = vmatpush1.bf16.msra.mxu0 %v1499
        %1539 = vmatprep.subr.bf16.mxu0 0
        %1540 = vmatpush1.bf16.msra.mxu0 %v1500
        %1541 = vmatprep.subr.bf16.mxu0 0
        %1542 = vmatpush1.bf16.msra.mxu0 %v1501
        %1543 = vmatprep.subr.bf16.mxu0 0
        %1544 = vmatpush1.bf16.msra.mxu0 %v1502
        %1545 = vmatprep.subr.bf16.mxu0 0
        %1546 = vmatpush1.bf16.msra.mxu0 %v1503
        %1547 = vmatprep.subr.bf16.mxu0 0
        %1548 = vmatpush1.bf16.msra.mxu0 %v1504
        %1549 = vmatprep.subr.bf16.mxu0 0
        %1550 = vmatpush1.bf16.msra.mxu0 %v1505
        %1551 = vmatprep.subr.bf16.mxu0 0
        %1552 = vmatpush1.bf16.msra.mxu0 %v1506
        %1553 = vmatprep.subr.bf16.mxu0 0
        %1554 = vmatpush1.bf16.msra.mxu0 %v1507
        %1555 = vmatprep.subr.bf16.mxu0 0
        %1556 = vmatpush1.bf16.msra.mxu0 %v1508
        %1557 = vmatprep.mubr.bf16.mxu0 %v1336
        %1558 = vmatmul.mubr.bf16.gmra.mrb[0].mxu0 %v1389
        %v1559 = vpop.f32.mrb[0].mxu0
        %v1560 = vadd.f32 %v1427, %v1559
        %v1561 = vpop.f32.mrb[0].mxu0
        %v1562 = vpop.f32.mrb[0].mxu0
        %v1563 = vadd.f32 %v1427, %v1562
        %v1564 = vpop.f32.mrb[0].mxu0
        %1565 = vdwg.mxu0
        %v1566 = vld [vmem:[#allocation10] sm:$0xf]
        %v1567 = vld [vmem:[#allocation10 + $0x4] sm:$0xf]
        %v1570 = vunpack.c.l.b16 %v1566
        %v1571 = vunpack.c.l.b16 %v1567
        %v1572 = vpack.c.b16 %v1571, %v1570
        %v1574 = vsel %vm1344, %v1572, 0
        %1576 = vmatprep.subr.bf16.mxu0 0
        %1577 = vmatpush1.bf16.msra.mxu0 %v1336
        %1578 = vmatprep.subr.bf16.mxu0 0
        %1579 = vmatpush1.bf16.msra.mxu0 0
        %1580 = vmatprep.subr.bf16.mxu0 0
        %1581 = vmatpush1.bf16.msra.mxu0 0
        %1582 = vmatprep.subr.bf16.mxu0 0
        %1583 = vmatpush1.bf16.msra.mxu0 0
        %1584 = vmatprep.subr.bf16.mxu0 0
        %1585 = vmatpush1.bf16.msra.mxu0 0
        %1586 = vmatprep.subr.bf16.mxu0 0
        %1587 = vmatpush1.bf16.msra.mxu0 0
        %1588 = vmatprep.subr.bf16.mxu0 0
        %1589 = vmatpush1.bf16.msra.mxu0 0
        %1590 = vmatprep.subr.bf16.mxu0 0
        %1591 = vmatpush1.bf16.msra.mxu0 0
        %1592 = vmatprep.subr.bf16.mxu0 0
        %1593 = vmatpush1.bf16.msra.mxu0 0
        %1594 = vmatprep.subr.bf16.mxu0 0
        %1595 = vmatpush1.bf16.msra.mxu0 0
        %1596 = vmatprep.subr.bf16.mxu0 0
        %1597 = vmatpush1.bf16.msra.mxu0 0
        %1598 = vmatprep.subr.bf16.mxu0 0
        %1599 = vmatpush1.bf16.msra.mxu0 0
        %1600 = vmatprep.subr.bf16.mxu0 0
        %1601 = vmatpush1.bf16.msra.mxu0 0
        %1602 = vmatprep.subr.bf16.mxu0 0
        %1603 = vmatpush1.bf16.msra.mxu0 0
        %1604 = vmatprep.subr.bf16.mxu0 0
        %1605 = vmatpush1.bf16.msra.mxu0 0
        %1606 = vmatprep.subr.bf16.mxu0 0
        %1607 = vmatpush1.bf16.msra.mxu0 0
        %1608 = vmatprep.mubr.bf16.mxu0 0
        %1609 = vmatmul.mubr.bf16.gmra.mrb[0].mxu0 %v1574
        %v1610 = vpop.f32.mrb[0].mxu0
        %v1611 = vadd.f32 0.0, %v1610
        %v1612 = vpop.f32.mrb[0].mxu0
        %v1613 = vpop.f32.mrb[0].mxu0
        %v1614 = vadd.f32 0.0, %v1613
        %v1615 = vpop.f32.mrb[0].mxu0
        %1616 = vdwg.mxu0
        %v1617 = vpack.c.bf16 %v1614, %v1611
        %v1618 = vld [vmem:[%s951] sm:$0xf]
        %v1619 = vld [vmem:[%s951 + $0x4] sm:$0xf]
        %v1620 = vld [vmem:[%s951 + $0x8] sm:$0xf]
        %v1621 = vld [vmem:[%s951 + $0xc] sm:$0xf]
        %v1622 = vld [vmem:[%s951 + $0x10] sm:$0xf]
        %v1623 = vld [vmem:[%s951 + $0x14] sm:$0xf]
        %v1624 = vld [vmem:[%s951 + $0x18] sm:$0xf]
        %v1625 = vld [vmem:[%s951 + $0x1c] sm:$0xf]
        %v1626 = vld [vmem:[%s951 + $0x20] sm:$0xf]
        %v1627 = vld [vmem:[%s951 + $0x24] sm:$0xf]
        %v1628 = vld [vmem:[%s951 + $0x28] sm:$0xf]
        %v1629 = vld [vmem:[%s951 + $0x2c] sm:$0xf]
        %v1630 = vld [vmem:[%s951 + $0x30] sm:$0xf]
        %v1631 = vld [vmem:[%s951 + $0x34] sm:$0xf]
        %v1632 = vld [vmem:[%s951 + $0x38] sm:$0xf]
        %v1633 = vld [vmem:[%s951 + $0x3c] sm:$0xf]
        %v1634 = vld [vmem:[%s951 + $0x40] sm:$0xf]
        %v1635 = vld [vmem:[%s951 + $0x44] sm:$0xf]
        %v1636 = vld [vmem:[%s951 + $0x48] sm:$0xf]
        %v1637 = vld [vmem:[%s951 + $0x4c] sm:$0xf]
        %v1638 = vld [vmem:[%s951 + $0x50] sm:$0xf]
        %v1639 = vld [vmem:[%s951 + $0x54] sm:$0xf]
        %v1640 = vld [vmem:[%s951 + $0x58] sm:$0xf]
        %v1641 = vld [vmem:[%s951 + $0x5c] sm:$0xf]
        %v1642 = vld [vmem:[%s951 + $0x60] sm:$0xf]
        %v1643 = vld [vmem:[%s951 + $0x64] sm:$0xf]
        %v1644 = vld [vmem:[%s951 + $0x68] sm:$0xf]
        %v1645 = vld [vmem:[%s951 + $0x6c] sm:$0xf]
        %v1646 = vld [vmem:[%s951 + $0x70] sm:$0xf]
        %v1647 = vld [vmem:[%s951 + $0x74] sm:$0xf]
        %v1648 = vld [vmem:[%s951 + $0x78] sm:$0xf]
        %v1649 = vld [vmem:[%s951 + $0x7c] sm:$0xf]
        %v1650 = vld [vmem:[%s1091] sm:$0x1]
        %v1652 = vlaneseq
        %v1653 = vshrl.u32 %v1652, 7
        %v1654 = vsub.s32 0, %v1653
        %v1655 = vrot.slane %v1650, %v1654
        %v1689 = vunpack.c.l.b16 %v1618
        %v1690 = vunpack.c.l.b16 %v1619
        %v1691 = vunpack.c.l.b16 %v1620
        %v1692 = vunpack.c.l.b16 %v1621
        %v1693 = vunpack.c.l.b16 %v1622
        %v1694 = vunpack.c.l.b16 %v1623
        %v1695 = vunpack.c.l.b16 %v1624
        %v1696 = vunpack.c.l.b16 %v1625
        %v1697 = vunpack.c.l.b16 %v1626
        %v1698 = vunpack.c.l.b16 %v1627
        %v1699 = vunpack.c.l.b16 %v1628
        %v1700 = vunpack.c.l.b16 %v1629
        %v1701 = vunpack.c.l.b16 %v1630
        %v1702 = vunpack.c.l.b16 %v1631
        %v1703 = vunpack.c.l.b16 %v1632
        %v1704 = vunpack.c.l.b16 %v1633
        %v1705 = vunpack.c.l.b16 %v1634
        %v1706 = vunpack.c.l.b16 %v1635
        %v1707 = vunpack.c.l.b16 %v1636
        %v1708 = vunpack.c.l.b16 %v1637
        %v1709 = vunpack.c.l.b16 %v1638
        %v1710 = vunpack.c.l.b16 %v1639
        %v1711 = vunpack.c.l.b16 %v1640
        %v1712 = vunpack.c.l.b16 %v1641
        %v1713 = vunpack.c.l.b16 %v1642
        %v1714 = vunpack.c.l.b16 %v1643
        %v1715 = vunpack.c.l.b16 %v1644
        %v1716 = vunpack.c.l.b16 %v1645
        %v1717 = vunpack.c.l.b16 %v1646
        %v1718 = vunpack.c.l.b16 %v1647
        %v1719 = vunpack.c.l.b16 %v1648
        %v1720 = vunpack.c.l.b16 %v1649
        %v1721 = vpack.c.b16 %v1690, %v1689
        %v1722 = vpack.c.b16 %v1692, %v1691
        %v1723 = vpack.c.b16 %v1694, %v1693
        %v1724 = vpack.c.b16 %v1696, %v1695
        %v1725 = vpack.c.b16 %v1698, %v1697
        %v1726 = vpack.c.b16 %v1700, %v1699
        %v1727 = vpack.c.b16 %v1702, %v1701
        %v1728 = vpack.c.b16 %v1704, %v1703
        %v1729 = vpack.c.b16 %v1706, %v1705
        %v1730 = vpack.c.b16 %v1708, %v1707
        %v1731 = vpack.c.b16 %v1710, %v1709
        %v1732 = vpack.c.b16 %v1712, %v1711
        %v1733 = vpack.c.b16 %v1714, %v1713
        %v1734 = vpack.c.b16 %v1716, %v1715
        %v1735 = vpack.c.b16 %v1718, %v1717
        %v1736 = vpack.c.b16 %v1720, %v1719
        %1753 = vmatprep.subr.bf16.mxu0 0
        %1754 = vmatpush1.bf16.msra.mxu0 %v1721
        %1755 = vmatprep.subr.bf16.mxu0 0
        %1756 = vmatpush1.bf16.msra.mxu0 %v1722
        %1757 = vmatprep.subr.bf16.mxu0 0
        %1758 = vmatpush1.bf16.msra.mxu0 %v1723
        %1759 = vmatprep.subr.bf16.mxu0 0
        %1760 = vmatpush1.bf16.msra.mxu0 %v1724
        %1761 = vmatprep.subr.bf16.mxu0 0
        %1762 = vmatpush1.bf16.msra.mxu0 %v1725
        %1763 = vmatprep.subr.bf16.mxu0 0
        %1764 = vmatpush1.bf16.msra.mxu0 %v1726
        %1765 = vmatprep.subr.bf16.mxu0 0
        %1766 = vmatpush1.bf16.msra.mxu0 %v1727
        %1767 = vmatprep.subr.bf16.mxu0 0
        %1768 = vmatpush1.bf16.msra.mxu0 %v1728
        %1769 = vmatprep.subr.bf16.mxu0 0
        %1770 = vmatpush1.bf16.msra.mxu0 %v1729
        %1771 = vmatprep.subr.bf16.mxu0 0
        %1772 = vmatpush1.bf16.msra.mxu0 %v1730
        %1773 = vmatprep.subr.bf16.mxu0 0
        %1774 = vmatpush1.bf16.msra.mxu0 %v1731
        %1775 = vmatprep.subr.bf16.mxu0 0
        %1776 = vmatpush1.bf16.msra.mxu0 %v1732
        %1777 = vmatprep.subr.bf16.mxu0 0
        %1778 = vmatpush1.bf16.msra.mxu0 %v1733
        %1779 = vmatprep.subr.bf16.mxu0 0
        %1780 = vmatpush1.bf16.msra.mxu0 %v1734
        %1781 = vmatprep.subr.bf16.mxu0 0
        %1782 = vmatpush1.bf16.msra.mxu0 %v1735
        %1783 = vmatprep.subr.bf16.mxu0 0
        %1784 = vmatpush1.bf16.msra.mxu0 %v1736
        %1785 = vmatprep.mubr.bf16.mxu0 %v1335
        %1786 = vmatmul.mubr.bf16.gmra.mrb[0].mxu0 %v1617
        %v1787 = vpop.f32.mrb[0].mxu0
        %v1788 = vadd.f32 %v1655, %v1787
        %v1789 = vpop.f32.mrb[0].mxu0
        %v1790 = vpop.f32.mrb[0].mxu0
        %v1791 = vadd.f32 %v1655, %v1790
        %v1792 = vpop.f32.mrb[0].mxu0
        %1793 = vdwg.mxu0
        %v1794 = vld [vmem:[%s960] sm:$0xf]
        %v1795 = vld [vmem:[%s960 + $0x4] sm:$0xf]
        %v1796 = vld [vmem:[%s960 + $0x8] sm:$0xf]
        %v1797 = vld [vmem:[%s960 + $0xc] sm:$0xf]
        %v1798 = vld [vmem:[%s960 + $0x10] sm:$0xf]
        %v1799 = vld [vmem:[%s960 + $0x14] sm:$0xf]
        %v1800 = vld [vmem:[%s960 + $0x18] sm:$0xf]
        %v1801 = vld [vmem:[%s960 + $0x1c] sm:$0xf]
        %v1802 = vld [vmem:[%s960 + $0x20] sm:$0xf]
        %v1803 = vld [vmem:[%s960 + $0x24] sm:$0xf]
        %v1804 = vld [vmem:[%s960 + $0x28] sm:$0xf]
        %v1805 = vld [vmem:[%s960 + $0x2c] sm:$0xf]
        %v1806 = vld [vmem:[%s960 + $0x30] sm:$0xf]
        %v1807 = vld [vmem:[%s960 + $0x34] sm:$0xf]
        %v1808 = vld [vmem:[%s960 + $0x38] sm:$0xf]
        %v1809 = vld [vmem:[%s960 + $0x3c] sm:$0xf]
        %v1826 = vunpack.c.l.b16 %v1794
        %v1827 = vunpack.c.l.b16 %v1795
        %v1828 = vunpack.c.l.b16 %v1796
        %v1829 = vunpack.c.l.b16 %v1797
        %v1830 = vunpack.c.l.b16 %v1798
        %v1831 = vunpack.c.l.b16 %v1799
        %v1832 = vunpack.c.l.b16 %v1800
        %v1833 = vunpack.c.l.b16 %v1801
        %v1834 = vunpack.c.l.b16 %v1802
        %v1835 = vunpack.c.l.b16 %v1803
        %v1836 = vunpack.c.l.b16 %v1804
        %v1837 = vunpack.c.l.b16 %v1805
        %v1838 = vunpack.c.l.b16 %v1806
        %v1839 = vunpack.c.l.b16 %v1807
        %v1840 = vunpack.c.l.b16 %v1808
        %v1841 = vunpack.c.l.b16 %v1809
        %v1842 = vpack.c.b16 %v1827, %v1826
        %v1843 = vpack.c.b16 %v1829, %v1828
        %v1844 = vpack.c.b16 %v1831, %v1830
        %v1845 = vpack.c.b16 %v1833, %v1832
        %v1846 = vpack.c.b16 %v1835, %v1834
        %v1847 = vpack.c.b16 %v1837, %v1836
        %v1848 = vpack.c.b16 %v1839, %v1838
        %v1849 = vpack.c.b16 %v1841, %v1840
        %1858 = vmatprep.subr.bf16.mxu0 0
        %1859 = vmatpush1.bf16.msra.mxu0 %v1842
        %1860 = vmatprep.subr.bf16.mxu0 0
        %1861 = vmatpush1.bf16.msra.mxu0 %v1843
        %1862 = vmatprep.subr.bf16.mxu0 0
        %1863 = vmatpush1.bf16.msra.mxu0 %v1844
        %1864 = vmatprep.subr.bf16.mxu0 0
        %1865 = vmatpush1.bf16.msra.mxu0 %v1845
        %1866 = vmatprep.subr.bf16.mxu0 0
        %1867 = vmatpush1.bf16.msra.mxu0 %v1846
        %1868 = vmatprep.subr.bf16.mxu0 0
        %1869 = vmatpush1.bf16.msra.mxu0 %v1847
        %1870 = vmatprep.subr.bf16.mxu0 0
        %1871 = vmatpush1.bf16.msra.mxu0 %v1848
        %1872 = vmatprep.subr.bf16.mxu0 0
        %1873 = vmatpush1.bf16.msra.mxu0 %v1849
        %1874 = vmatprep.subr.bf16.mxu0 0
        %1875 = vmatpush1.bf16.msra.mxu0 0
        %1876 = vmatprep.subr.bf16.mxu0 0
        %1877 = vmatpush1.bf16.msra.mxu0 0
        %1878 = vmatprep.subr.bf16.mxu0 0
        %1879 = vmatpush1.bf16.msra.mxu0 0
        %1880 = vmatprep.subr.bf16.mxu0 0
        %1881 = vmatpush1.bf16.msra.mxu0 0
        %1882 = vmatprep.subr.bf16.mxu0 0
        %1883 = vmatpush1.bf16.msra.mxu0 0
        %1884 = vmatprep.subr.bf16.mxu0 0
        %1885 = vmatpush1.bf16.msra.mxu0 0
        %1886 = vmatprep.subr.bf16.mxu0 0
        %1887 = vmatpush1.bf16.msra.mxu0 0
        %1888 = vmatprep.subr.bf16.mxu0 0
        %1889 = vmatpush1.bf16.msra.mxu0 0
        %1890 = vmatprep.mubr.bf16.mxu0 0
        %1891 = vmatmul.mubr.bf16.gmra.mrb[0].mxu0 %v1336
        %v1892 = vpop.f32.mrb[0].mxu0
        %v1893 = vadd.f32 0.0, %v1892
        %v1894 = vpop.f32.mrb[0].mxu0
        %v1895 = vpop.f32.mrb[0].mxu0
        %v1896 = vadd.f32 0.0, %v1895
        %v1897 = vpop.f32.mrb[0].mxu0
        %1898 = vdwg.mxu0
        %v1899 = vld [vmem:[%s976] sm:$0x1]
        %v1901 = vlaneseq
        %v1902 = vshrl.u32 %v1901, 7
        %v1903 = vsub.s32 0, %v1902
        %v1904 = vrot.slane %v1899, %v1903
        %v1906 = vmul.f32 %v1893, %v1904
        %v1907 = vmul.f32 %v1896, %v1904
        %1908 = vadd.xlane.f32.xlu0 %v1906
        %v1909 = vpop.xlane.xlu0 %1908
        %1910 = vadd.xlane.f32.xlu0 %v1907
        %v1911 = vpop.xlane.xlu0 %1910
        %v1912 = vld [vmem:[%s968] sm:$0x1]
        %1913 = vmatprep.subr.mxu0 0.0
        %1914 = vmatpush1.xpose.msra.mxu0 %v1893
        %1915 = vmatprep.subr.mxu0 0.0
        %1916 = vmatpush1.xpose.msra.mxu0 %v1896
        %1917 = vmatprep.subr.mxu0 0.0
        %1918 = vmatpush1.xpose.msra.mxu0 0.0
        %1919 = vmatprep.subr.mxu0 0.0
        %1920 = vmatpush1.xpose.msra.mxu0 0.0
        %1921 = vmatprep.subr.mxu0 0.0
        %1922 = vmatpush1.xpose.msra.mxu0 0.0
        %1923 = vmatprep.subr.mxu0 0.0
        %1924 = vmatpush1.xpose.msra.mxu0 0.0
        %1925 = vmatprep.subr.mxu0 0.0
        %1926 = vmatpush1.xpose.msra.mxu0 0.0
        %1927 = vmatprep.subr.mxu0 0.0
        %1928 = vmatpush1.xpose.msra.mxu0 0.0
        %1929 = vmatprep.subr.mxu0 0.0
        %1930 = vmatpush1.xpose.msra.mxu0 0.0
        %1931 = vmatprep.subr.mxu0 0.0
        %1932 = vmatpush1.xpose.msra.mxu0 0.0
        %1933 = vmatprep.subr.mxu0 0.0
        %1934 = vmatpush1.xpose.msra.mxu0 0.0
        %1935 = vmatprep.subr.mxu0 0.0
        %1936 = vmatpush1.xpose.msra.mxu0 0.0
        %1937 = vmatprep.subr.mxu0 0.0
        %1938 = vmatpush1.xpose.msra.mxu0 0.0
        %1939 = vmatprep.subr.mxu0 0.0
        %1940 = vmatpush1.xpose.msra.mxu0 0.0
        %1941 = vmatprep.subr.mxu0 0.0
        %1942 = vmatpush1.xpose.msra.mxu0 0.0
        %1943 = vmatprep.subr.mxu0 0.0
        %1944 = vmatpush1.xpose.msra.mxu0 0.0
        %1945 = vmatprep.subr.mxu0 0.0
        %1946 = vmatpush1.xpose.msra.mxu0 0.0
        %1947 = vmatprep.subr.mxu0 0.0
        %1948 = vmatpush1.xpose.msra.mxu0 0.0
        %1949 = vmatprep.subr.mxu0 0.0
        %1950 = vmatpush1.xpose.msra.mxu0 0.0
        %1951 = vmatprep.subr.mxu0 0.0
        %1952 = vmatpush1.xpose.msra.mxu0 0.0
        %1953 = vmatprep.subr.mxu0 0.0
        %1954 = vmatpush1.xpose.msra.mxu0 0.0
        %1955 = vmatprep.subr.mxu0 0.0
        %1956 = vmatpush1.xpose.msra.mxu0 0.0
        %1957 = vmatprep.subr.mxu0 0.0
        %1958 = vmatpush1.xpose.msra.mxu0 0.0
        %1959 = vmatprep.subr.mxu0 0.0
        %1960 = vmatpush1.xpose.msra.mxu0 0.0
        %1961 = vmatprep.subr.mxu0 0.0
        %1962 = vmatpush1.xpose.msra.mxu0 0.0
        %1963 = vmatprep.subr.mxu0 0.0
        %1964 = vmatpush1.xpose.msra.mxu0 0.0
        %1965 = vmatprep.subr.mxu0 0.0
        %1966 = vmatpush1.xpose.msra.mxu0 0.0
        %1967 = vmatprep.subr.mxu0 0.0
        %1968 = vmatpush1.xpose.msra.mxu0 0.0
        %1969 = vmatprep.subr.mxu0 0.0
        %1970 = vmatpush1.xpose.msra.mxu0 0.0
        %1971 = vmatprep.subr.mxu0 0.0
        %1972 = vmatpush1.xpose.msra.mxu0 0.0
        %1973 = vmatprep.subr.mxu0 0.0
        %1974 = vmatpush1.xpose.msra.mxu0 0.0
        %1975 = vmatprep.subr.mxu0 0.0
        %1976 = vmatpush1.xpose.msra.mxu0 0.0
        %1977 = vmatprep.mubr.f32.mxu0 0.0
        %1978 = vmatmul.mubr.f32.gmra.mrb[0].mxu0 %v1912
        %v1979 = vpop.f32.mrb[0].mxu0
        %v1980 = vadd.f32 0.0, %v1979
        %v1981 = vpop.f32.mrb[0].mxu0
        %1982 = vdwg.mxu0
        %v1983 = vlaneseq
        %v1984 = vshrl.u32 %v1983, 7
        %v1985 = vsub.s32 0, %v1984
        %v1986 = vrot.slane %v1980, %v1985
        %v1987 = vadd.f32 %v1909, %v1986
        %v1988 = vadd.f32 %v1911, %v1986
        %vm1989 = vcmp.ge.f32.partialorder %v1987, 0.0
        %vm1990 = vcmp.ge.f32.partialorder %v1988, 0.0
        %v1991 = vmul.f32 %v1987, 0.2
        %v1992 = vmul.f32 %v1988, 0.2
        %v1993 = vsel %vm1989, %v1987, %v1991
        %v1994 = vsel %vm1990, %v1988, %v1992
        %v1995 = vld [vmem:[#allocation12] sm:$0xff]
        %v1996 = vld [vmem:[#allocation12 + $0x8] sm:$0xff]
        %v1997 = vadd.f32 %v1993, %v1995
        %v1998 = vadd.f32 %v1994, %v1996
        %v1999 = vsel %vm1344, %v1997, -inf
        %2000 = vmax.xlane.f32.xlu0 %v1999
        %v2001 = vpop.xlane.xlu0 %2000
        %v2002 = vsel %vm1344, %v1998, -inf
        %2003 = vmax.xlane.f32.xlu0 %v2002
        %v2004 = vpop.xlane.xlu0 %2003
        %v2005 = vsub.f32 %v1997, %v2001
        %v2006 = vsub.f32 %v1998, %v2004
        %v2007 = vmul.f32 %v2005, 1.442695
        %v2008 = vpow.pop %v2007
        %v2009 = vmul.f32 %v2006, 1.442695
        %v2010 = vpow.pop %v2009
        %v2011 = vsel %vm1344, %v2008, 0.0
        %2012 = vadd.xlane.f32.xlu0 %v2011
        %v2013 = vpop.xlane.xlu0 %2012
        %v2014 = vsel %vm1344, %v2010, 0.0
        %2015 = vadd.xlane.f32.xlu0 %v2014
        %v2016 = vpop.xlane.xlu0 %2015
        %v2017 = vrcp.pop %v2013
        %v2018 = vrcp.pop %v2016
        %v2019 = vmul.f32 %v2008, %v2017
        %v2020 = vmul.f32 %v2010, %v2018
        %v2021 = vld [vmem:[%s984] sm:$0x1]
        %v2023 = vlaneseq
        %v2024 = vshrl.u32 %v2023, 7
        %v2025 = vsub.s32 0, %v2024
        %v2026 = vrot.slane %v2021, %v2025
        %v2028 = vmul.f32 %v1893, %v2026
        %v2029 = vmul.f32 %v1896, %v2026
        %v2030 = vpack.c.bf16 %v2029, %v2028
        %v2031 = vpack.c.bf16 %v2020, %v2019
        %v2032 = vld [vmem:[%s992] sm:$0x1]
        %v2034 = vlaneseq
        %v2035 = vshrl.u32 %v2034, 7
        %v2036 = vsub.s32 0, %v2035
        %v2037 = vrot.slane %v2032, %v2036
        %v2040 = vsel %vm1344, %v2031, 0
        %2042 = vmatprep.subr.bf16.mxu0 0
        %2043 = vmatpush1.bf16.msra.mxu0 %v2030
        %2044 = vmatprep.subr.bf16.mxu0 0
        %2045 = vmatpush1.bf16.msra.mxu0 0
        %2046 = vmatprep.subr.bf16.mxu0 0
        %2047 = vmatpush1.bf16.msra.mxu0 0
        %2048 = vmatprep.subr.bf16.mxu0 0
        %2049 = vmatpush1.bf16.msra.mxu0 0
        %2050 = vmatprep.subr.bf16.mxu0 0
        %2051 = vmatpush1.bf16.msra.mxu0 0
        %2052 = vmatprep.subr.bf16.mxu0 0
        %2053 = vmatpush1.bf16.msra.mxu0 0
        %2054 = vmatprep.subr.bf16.mxu0 0
        %2055 = vmatpush1.bf16.msra.mxu0 0
        %2056 = vmatprep.subr.bf16.mxu0 0
        %2057 = vmatpush1.bf16.msra.mxu0 0
        %2058 = vmatprep.subr.bf16.mxu0 0
        %2059 = vmatpush1.bf16.msra.mxu0 0
        %2060 = vmatprep.subr.bf16.mxu0 0
        %2061 = vmatpush1.bf16.msra.mxu0 0
        %2062 = vmatprep.subr.bf16.mxu0 0
        %2063 = vmatpush1.bf16.msra.mxu0 0
        %2064 = vmatprep.subr.bf16.mxu0 0
        %2065 = vmatpush1.bf16.msra.mxu0 0
        %2066 = vmatprep.subr.bf16.mxu0 0
        %2067 = vmatpush1.bf16.msra.mxu0 0
        %2068 = vmatprep.subr.bf16.mxu0 0
        %2069 = vmatpush1.bf16.msra.mxu0 0
        %2070 = vmatprep.subr.bf16.mxu0 0
        %2071 = vmatpush1.bf16.msra.mxu0 0
        %2072 = vmatprep.subr.bf16.mxu0 0
        %2073 = vmatpush1.bf16.msra.mxu0 0
        %2074 = vmatprep.mubr.bf16.mxu0 0
        %2075 = vmatmul.mubr.bf16.gmra.mrb[0].mxu0 %v2040
        %v2076 = vpop.f32.mrb[0].mxu0
        %v2077 = vadd.f32 %v2037, %v2076
        %v2078 = vpop.f32.mrb[0].mxu0
        %v2079 = vpop.f32.mrb[0].mxu0
        %v2080 = vadd.f32 %v2037, %v2079
        %v2081 = vpop.f32.mrb[0].mxu0
        %2082 = vdwg.mxu0
        %v2083 = vmax.f32 %v1788, 0.0
        %v2084 = vmax.f32 %v1791, 0.0
        %v2085 = vadd.f32 %v1560, %v2077
        %v2086 = vadd.f32 %v1563, %v2080
        %v2087 = vmax.f32 %v2085, 0.0
        %v2088 = vmax.f32 %v2086, 0.0
        %2089 = vst [vmem:[#allocation2] sm:$0xff] %v2083
        %2090 = vst [vmem:[#allocation2 + $0x8] sm:$0xff] %v2084
        %2091 = vst [vmem:[#allocation3] sm:$0xff] %v2087
        %2092 = vst [vmem:[#allocation3 + $0x8] sm:$0xff] %v2088
        %p2093 = scmp.eq.s32.totalorder %s54, 1
        // Predicated region
        $region181: #{tpu_custom_call.1} parent=107 // pred_check
          %p2094 = pneg %p2093
        $region182: #{tpu_custom_call.1} parent=107 // pred_check_branch
          %2096 = sbr.rel (%p2094) target = $region184
        $region183: #{tpu_custom_call.1} parent=107 // pred_region
          %v2097 = vpack.c.bf16 %v2084, %v2083
          %v2098 = vld [vmem:[%s18] sm:$0xf]
          %v2099 = vld [vmem:[%s18 + $0x4] sm:$0xf]
          %v2100 = vld [vmem:[%s18 + $0x8] sm:$0xf]
          %v2101 = vld [vmem:[%s18 + $0xc] sm:$0xf]
          %v2102 = vld [vmem:[%s18 + $0x10] sm:$0xf]
          %v2103 = vld [vmem:[%s18 + $0x14] sm:$0xf]
          %v2104 = vld [vmem:[%s18 + $0x18] sm:$0xf]
          %v2105 = vld [vmem:[%s18 + $0x1c] sm:$0xf]
          %v2106 = vld [vmem:[%s18 + $0x20] sm:$0xf]
          %v2107 = vld [vmem:[%s18 + $0x24] sm:$0xf]
          %v2108 = vld [vmem:[%s18 + $0x28] sm:$0xf]
          %v2109 = vld [vmem:[%s18 + $0x2c] sm:$0xf]
          %v2110 = vld [vmem:[%s18 + $0x30] sm:$0xf]
          %v2111 = vld [vmem:[%s18 + $0x34] sm:$0xf]
          %v2112 = vld [vmem:[%s18 + $0x38] sm:$0xf]
          %v2113 = vld [vmem:[%s18 + $0x3c] sm:$0xf]
          %v2114 = vld [vmem:[%s19] sm:$0x1]
          %v2116 = vlaneseq
          %v2117 = vshrl.u32 %v2116, 7
          %v2118 = vsub.s32 0, %v2117
          %v2119 = vrot.slane %v2114, %v2118
          %v2137 = vunpack.c.l.b16 %v2098
          %v2138 = vunpack.c.l.b16 %v2099
          %v2139 = vunpack.c.l.b16 %v2100
          %v2140 = vunpack.c.l.b16 %v2101
          %v2141 = vunpack.c.l.b16 %v2102
          %v2142 = vunpack.c.l.b16 %v2103
          %v2143 = vunpack.c.l.b16 %v2104
          %v2144 = vunpack.c.l.b16 %v2105
          %v2145 = vunpack.c.l.b16 %v2106
          %v2146 = vunpack.c.l.b16 %v2107
          %v2147 = vunpack.c.l.b16 %v2108
          %v2148 = vunpack.c.l.b16 %v2109
          %v2149 = vunpack.c.l.b16 %v2110
          %v2150 = vunpack.c.l.b16 %v2111
          %v2151 = vunpack.c.l.b16 %v2112
          %v2152 = vunpack.c.l.b16 %v2113
          %v2153 = vpack.c.b16 %v2138, %v2137
          %v2154 = vpack.c.b16 %v2140, %v2139
          %v2155 = vpack.c.b16 %v2142, %v2141
          %v2156 = vpack.c.b16 %v2144, %v2143
          %v2157 = vpack.c.b16 %v2146, %v2145
          %v2158 = vpack.c.b16 %v2148, %v2147
          %v2159 = vpack.c.b16 %v2150, %v2149
          %v2160 = vpack.c.b16 %v2152, %v2151
          %2169 = vmatprep.subr.bf16.mxu0 0
          %2170 = vmatpush1.bf16.msra.mxu0 %v2153
          %2171 = vmatprep.subr.bf16.mxu0 0
          %2172 = vmatpush1.bf16.msra.mxu0 %v2154
          %2173 = vmatprep.subr.bf16.mxu0 0
          %2174 = vmatpush1.bf16.msra.mxu0 %v2155
          %2175 = vmatprep.subr.bf16.mxu0 0
          %2176 = vmatpush1.bf16.msra.mxu0 %v2156
          %2177 = vmatprep.subr.bf16.mxu0 0
          %2178 = vmatpush1.bf16.msra.mxu0 %v2157
          %2179 = vmatprep.subr.bf16.mxu0 0
          %2180 = vmatpush1.bf16.msra.mxu0 %v2158
          %2181 = vmatprep.subr.bf16.mxu0 0
          %2182 = vmatpush1.bf16.msra.mxu0 %v2159
          %2183 = vmatprep.subr.bf16.mxu0 0
          %2184 = vmatpush1.bf16.msra.mxu0 %v2160
          %2185 = vmatprep.subr.bf16.mxu0 0
          %2186 = vmatpush1.bf16.msra.mxu0 0
          %2187 = vmatprep.subr.bf16.mxu0 0
          %2188 = vmatpush1.bf16.msra.mxu0 0
          %2189 = vmatprep.subr.bf16.mxu0 0
          %2190 = vmatpush1.bf16.msra.mxu0 0
          %2191 = vmatprep.subr.bf16.mxu0 0
          %2192 = vmatpush1.bf16.msra.mxu0 0
          %2193 = vmatprep.subr.bf16.mxu0 0
          %2194 = vmatpush1.bf16.msra.mxu0 0
          %2195 = vmatprep.subr.bf16.mxu0 0
          %2196 = vmatpush1.bf16.msra.mxu0 0
          %2197 = vmatprep.subr.bf16.mxu0 0
          %2198 = vmatpush1.bf16.msra.mxu0 0
          %2199 = vmatprep.subr.bf16.mxu0 0
          %2200 = vmatpush1.bf16.msra.mxu0 0
          %2201 = vmatprep.mubr.bf16.mxu0 0
          %2202 = vmatmul.mubr.bf16.gmra.mrb[0].mxu0 %v2097
          %v2203 = vpop.f32.mrb[0].mxu0
          %v2204 = vadd.f32 %v2119, %v2203
          %v2205 = vpop.f32.mrb[0].mxu0
          %v2206 = vpop.f32.mrb[0].mxu0
          %v2207 = vadd.f32 %v2119, %v2206
          %v2208 = vpop.f32.mrb[0].mxu0
          %2209 = vdwg.mxu0
          %2210 = vst [vmem:[#allocation31] sm:$0xff] %v2204
          %2211 = vst [vmem:[#allocation31 + $0x8] sm:$0xff] %v2207
          %v2212 = vpack.c.bf16 %v2088, %v2087
          %v2213 = vld [vmem:[#allocation30] sm:$0xf]
          %v2214 = vld [vmem:[#allocation30 + $0x4] sm:$0xf]
          %v2215 = vld [vmem:[#allocation30 + $0x8] sm:$0xf]
          %v2216 = vld [vmem:[#allocation30 + $0xc] sm:$0xf]
          %v2217 = vld [vmem:[#allocation30 + $0x10] sm:$0xf]
          %v2218 = vld [vmem:[#allocation30 + $0x14] sm:$0xf]
          %v2219 = vld [vmem:[#allocation30 + $0x18] sm:$0xf]
          %v2220 = vld [vmem:[#allocation30 + $0x1c] sm:$0xf]
          %v2221 = vld [vmem:[#allocation30 + $0x20] sm:$0xf]
          %v2222 = vld [vmem:[#allocation30 + $0x24] sm:$0xf]
          %v2223 = vld [vmem:[#allocation30 + $0x28] sm:$0xf]
          %v2224 = vld [vmem:[#allocation30 + $0x2c] sm:$0xf]
          %v2225 = vld [vmem:[#allocation30 + $0x30] sm:$0xf]
          %v2226 = vld [vmem:[#allocation30 + $0x34] sm:$0xf]
          %v2227 = vld [vmem:[#allocation30 + $0x38] sm:$0xf]
          %v2228 = vld [vmem:[#allocation30 + $0x3c] sm:$0xf]
          %v2229 = vld [vmem:[%s21] sm:$0x1]
          %v2231 = vlaneseq
          %v2232 = vshrl.u32 %v2231, 7
          %v2233 = vsub.s32 0, %v2232
          %v2234 = vrot.slane %v2229, %v2233
          %v2252 = vunpack.c.l.b16 %v2213
          %v2253 = vunpack.c.l.b16 %v2214
          %v2254 = vunpack.c.l.b16 %v2215
          %v2255 = vunpack.c.l.b16 %v2216
          %v2256 = vunpack.c.l.b16 %v2217
          %v2257 = vunpack.c.l.b16 %v2218
          %v2258 = vunpack.c.l.b16 %v2219
          %v2259 = vunpack.c.l.b16 %v2220
          %v2260 = vunpack.c.l.b16 %v2221
          %v2261 = vunpack.c.l.b16 %v2222
          %v2262 = vunpack.c.l.b16 %v2223
          %v2263 = vunpack.c.l.b16 %v2224
          %v2264 = vunpack.c.l.b16 %v2225
          %v2265 = vunpack.c.l.b16 %v2226
          %v2266 = vunpack.c.l.b16 %v2227
          %v2267 = vunpack.c.l.b16 %v2228
          %v2268 = vpack.c.b16 %v2253, %v2252
          %v2269 = vpack.c.b16 %v2255, %v2254
          %v2270 = vpack.c.b16 %v2257, %v2256
          %v2271 = vpack.c.b16 %v2259, %v2258
          %v2272 = vpack.c.b16 %v2261, %v2260
          %v2273 = vpack.c.b16 %v2263, %v2262
          %v2274 = vpack.c.b16 %v2265, %v2264
          %v2275 = vpack.c.b16 %v2267, %v2266
          %2284 = vmatprep.subr.bf16.mxu0 0
          %2285 = vmatpush1.bf16.msra.mxu0 %v2268
          %2286 = vmatprep.subr.bf16.mxu0 0
          %2287 = vmatpush1.bf16.msra.mxu0 %v2269
          %2288 = vmatprep.subr.bf16.mxu0 0
          %2289 = vmatpush1.bf16.msra.mxu0 %v2270
          %2290 = vmatprep.subr.bf16.mxu0 0
          %2291 = vmatpush1.bf16.msra.mxu0 %v2271
          %2292 = vmatprep.subr.bf16.mxu0 0
          %2293 = vmatpush1.bf16.msra.mxu0 %v2272
          %2294 = vmatprep.subr.bf16.mxu0 0
          %2295 = vmatpush1.bf16.msra.mxu0 %v2273
          %2296 = vmatprep.subr.bf16.mxu0 0
          %2297 = vmatpush1.bf16.msra.mxu0 %v2274
          %2298 = vmatprep.subr.bf16.mxu0 0
          %2299 = vmatpush1.bf16.msra.mxu0 %v2275
          %2300 = vmatprep.subr.bf16.mxu0 0
          %2301 = vmatpush1.bf16.msra.mxu0 0
          %2302 = vmatprep.subr.bf16.mxu0 0
          %2303 = vmatpush1.bf16.msra.mxu0 0
          %2304 = vmatprep.subr.bf16.mxu0 0
          %2305 = vmatpush1.bf16.msra.mxu0 0
          %2306 = vmatprep.subr.bf16.mxu0 0
          %2307 = vmatpush1.bf16.msra.mxu0 0
          %2308 = vmatprep.subr.bf16.mxu0 0
          %2309 = vmatpush1.bf16.msra.mxu0 0
          %2310 = vmatprep.subr.bf16.mxu0 0
          %2311 = vmatpush1.bf16.msra.mxu0 0
          %2312 = vmatprep.subr.bf16.mxu0 0
          %2313 = vmatpush1.bf16.msra.mxu0 0
          %2314 = vmatprep.subr.bf16.mxu0 0
          %2315 = vmatpush1.bf16.msra.mxu0 0
          %2316 = vmatprep.mubr.bf16.mxu0 0
          %2317 = vmatmul.mubr.bf16.gmra.mrb[0].mxu0 %v2212
          %v2318 = vpop.f32.mrb[0].mxu0
          %v2319 = vadd.f32 %v2234, %v2318
          %v2320 = vpop.f32.mrb[0].mxu0
          %v2321 = vpop.f32.mrb[0].mxu0
          %v2322 = vadd.f32 %v2234, %v2321
          %v2323 = vpop.f32.mrb[0].mxu0
          %2324 = vdwg.mxu0
          %2325 = vst [vmem:[#allocation32] sm:$0xff] %v2319
          %2326 = vst [vmem:[#allocation32 + $0x8] sm:$0xff] %v2322
        $region184: #{tpu_custom_call.1} parent=107 // pred_fallthru
          _
        // Predicated region
        $region185: #{tpu_custom_call.1} parent=107 // pred_check
          %p2327 = pneg %p574
        $region186: #{tpu_custom_call.1} parent=107 // pred_check_branch
          %2329 = sbr.rel (%p2327) target = $region188
        $region187: #{tpu_custom_call.1} parent=107 // pred_region
          %s2331 = ssub.s32 256, 256
          %2332 = vsyncadd [#allocation6], %s2331
          %s2333 = sshll.u32 [#allocation31], 4
          %s2334 = int_to_ptr.vmem [resolvable:$true] %s2333
          %2339 = dma.vmem_to_hbm [thread:$0]  %s2334, 256, %s22, [#allocation6], 128, 128, 8
        $region188: #{tpu_custom_call.1} parent=107 // pred_fallthru
          _
        // Predicated region
        $region189: #{tpu_custom_call.1} parent=107 // pred_check
          %p2340 = pneg %p595
        $region190: #{tpu_custom_call.1} parent=107 // pred_check_branch
          %2342 = sbr.rel (%p2340) target = $region192
        $region191: #{tpu_custom_call.1} parent=107 // pred_region
          %s2344 = ssub.s32 256, 256
          %2345 = vsyncadd [#allocation33], %s2344
          %s2346 = sshll.u32 [#allocation32], 4
          %s2347 = int_to_ptr.vmem [resolvable:$true] %s2346
          %2352 = dma.vmem_to_hbm [thread:$0]  %s2347, 256, %s23, [#allocation33], 128, 128, 8
        $region192: #{tpu_custom_call.1} parent=107 // pred_fallthru
          _
        // Predicated region
        $region193: #{tpu_custom_call.1} parent=107 // pred_check
          %p2353 = pneg %p574
        $region194: #{tpu_custom_call.1} parent=107 // pred_check_branch
          %2355 = sbr.rel (%p2353) target = $region196
        $region195: #{tpu_custom_call.1} parent=107 // pred_region
          %2356 = dma.done [#allocation6], 256
        $region196: #{tpu_custom_call.1} parent=107 // pred_fallthru
          _
        // Predicated region
        $region197: #{tpu_custom_call.1} parent=107 // pred_check
          %p2357 = pneg %p595
        $region198: #{tpu_custom_call.1} parent=107 // pred_check_branch
          %2359 = sbr.rel (%p2357) target = $region200
        $region199: #{tpu_custom_call.1} parent=107 // pred_region
          %2360 = dma.done [#allocation33], 256
        $region200: #{tpu_custom_call.1} parent=107 // pred_fallthru
          _
      $region108: #{tpu_custom_call.1} parent=5 // pred_fallthru
        _
      %p2361 = scmp.le.s32.totalorder 2, %s49
      // Predicated region
      $region201: #{tpu_custom_call.1} parent=5 // pred_check
        %p2362 = pneg %p2361
      $region202: #{tpu_custom_call.1} parent=5 // pred_check_branch
        %2364 = sbr.rel (%p2362) target = $region204
      $region203: #{tpu_custom_call.1} parent=5 // pred_region
        %s2365 = ssub.s32 %s49, 2
      $region204: #{tpu_custom_call.1} parent=5 // pred_fallthru
        _
    $region6: #{tpu_custom_call.1} parent=1 // loop_footer
      %s53 = sadd.s32 1, %s49
    $region7: #{tpu_custom_call.1} parent=1 // loop_footer_branch
      %48 = sbr.rel target = $region3
    $region8: #{tpu_custom_call.1} parent=1 // loop_exit
      _
    %2366 = vsyncpa [#allocation5], 1
    %s2367 = scalar_lea.sflag [#allocation5], 1
    %2368 = vsyncpa %s2367, 1
    %2369 = vsyncpa [#allocation8], 1
    %2370 = vsyncpa [#allocation11], 1
    %2371 = vsyncpa [#allocation14], 1
    %2372 = vsyncpa [#allocation17], 1
    %2373 = vsyncpa [#allocation20], 1
    %s2374 = scalar_lea.sflag [#allocation20], 1
    %2375 = vsyncpa %s2374, 1
    %2376 = vsyncpa [#allocation23], 1
    %s2377 = scalar_lea.sflag [#allocation23], 1
    %2378 = vsyncpa %s2377, 1
    %2379 = vsyncpa [#allocation26], 1
    %s2380 = scalar_lea.sflag [#allocation26], 1
    %2381 = vsyncpa %s2380, 1
    %2382 = vsyncpa [#allocation29], 1
    %s2383 = scalar_lea.sflag [#allocation29], 1
    %2384 = vsyncpa %s2383, 1
    %2385 = vsyncpa [#allocation6], 1
    %s2386 = scalar_lea.sflag [#allocation6], 1
    %2387 = vsyncpa %s2386, 1
    %2388 = vsyncpa [#allocation33], 1

</llo_original>
